<compile_context>
chip_gen: v7x
topology: tpu7x:2x2x1
jax: 0.10.0
libtpu: 0.0.40
codegen_flags: <defaults>
</compile_context>

<pallas_src>
import numpy as np
import jax
import jax.numpy as jnp
from jax import lax
from jax.experimental import pallas as pl
from jax.experimental.pallas import tpu as pltpu

# ----------------------------- configuration --------------------------------
B = 2                      # batch
C_IN = 4                   # in_c
C_OUT = 16                 # out_c (>= 16 so CALayer's reduction=16 bottleneck is >= 1)
H = W = 16                 # spatial size of `skip` (and of the upsampled `x`)
H2, W2 = H // 2, W // 2    # spatial size of `x` before the 2x bilinear upsample
KLEN = 5                   # axial depthwise kernel length
PAD = KLEN // 2
RATIO = 0.7                # HybridNormalization ratio
EPS = 1e-5                 # InstanceNorm2d / BatchNorm2d eps
C_RED = C_OUT // 16        # CALayer bottleneck width (== 1 here)

HW = H * W                 # 256 -> lane-dense last dim (2 x 128 lanes)
N_IN = B * C_IN            # 8   rows of the pre-pointwise feature matrices
N_OUT = B * C_OUT          # 32  rows of the post-pointwise feature matrices

# --------------------- deterministic module parameters ----------------------
_rng = np.random.default_rng(0)
def _p(*shape, scale=0.2):
    return (_rng.standard_normal(shape) * scale).astype(np.float32)

CONV1_W = _p(C_IN, 2 * C_IN)          # conv1 (1x1): in = cat(skip, up)
CONV1_B = _p(C_IN)
DW_H_W = _p(C_IN, KLEN)               # horizontal depthwise (1 x KLEN) per channel
DW_H_B = _p(C_IN)
DW_V_W = _p(C_IN, KLEN)               # vertical depthwise (KLEN x 1) per channel
DW_V_B = _p(C_IN)
PW_W = _p(C_OUT, C_IN)                # axial pointwise 1x1
PW_B = _p(C_OUT)
BN_W = (_p(C_OUT, scale=0.1) + 1.0)   # BatchNorm affine weight (around 1)
BN_B = _p(C_OUT)                      # BatchNorm affine bias
CA_L1 = _p(C_RED, C_OUT)              # CALayer: Linear(C_OUT, C_RED, bias=False)
CA_L2 = _p(C_OUT, C_RED)              # CALayer: Linear(C_RED, C_OUT, bias=False)
CONV2_W = _p(C_OUT, C_OUT)            # conv2 (1x1)
CONV2_B = _p(C_OUT)


def _upsample_matrix(n_in, n_out):
    # nn.Upsample(scale_factor=2, mode='bilinear', align_corners=True):
    # src = i * (n_in - 1) / (n_out - 1); separable in H and W.
    U = np.zeros((n_out, n_in), dtype=np.float64)
    scale = (n_in - 1) / (n_out - 1)
    for i in range(n_out):
        s = i * scale
        i0 = min(int(np.floor(s)), n_in - 1)
        i1 = min(i0 + 1, n_in - 1)
        f = s - i0
        U[i, i0] += 1.0 - f
        U[i, i1] += f
    return U

U_H = _upsample_matrix(H2, H)          # (H, H2)
U_W = _upsample_matrix(W2, W)          # (W, W2)

# ------------------- packed constant-slab layout (host side) -----------------
# Slab "BIG" (256 lanes wide):   rows [R_UK, R_UK+64)   upsample kron matrix (transposed)
#                                rows [R_HC, R_HC+40)   horizontal tap coef*mask planes
#                                rows [R_VC, R_VC+40)   vertical tap coef*mask planes
R_UK = 0
R_HC = R_UK + H2 * W2                  # 64
R_VC = R_HC + KLEN * N_IN              # 104
BIG_ROWS = R_VC + KLEN * N_IN          # 144

# Slab "WSLAB" (32 lanes wide): all small square weights + bias columns, sublane packed
R_MAVG = 0                             # (N_OUT, N_OUT)  batch-mean matrix
R_MCA1 = R_MAVG + N_OUT                # (N_OUT, N_OUT)  CALayer folded first linear
R_W2 = R_MCA1 + N_OUT                  # (N_OUT, N_OUT)  conv2 block-diag
R_WPW = R_W2 + N_OUT                   # (N_OUT, N_IN)   pointwise block-diag
R_W1 = R_WPW + N_OUT                   # (N_IN, 2*N_IN)  fused conv1 block-diag
R_BIAS = R_W1 + N_IN                   # (N_OUT, 8)      bias columns
WSLAB_ROWS = R_BIAS + N_OUT            # 168
# bias column indices
C_BPW, C_BNW, C_BNB, C_L2, C_B2, C_B1, C_BHV = range(7)


def _derived_operands():
    """Precompute the two packed constant slabs (everything folded host-side)."""
    assert C_RED == 1, "CALayer folding below assumes a 1-unit bottleneck"
    f32 = np.float32
    eyeB = np.eye(B, dtype=f32)

    # bilinear upsample of a flattened (H2*W2,) image -> (H*W,) image
    uk_t = np.kron(U_H, U_W).T.astype(f32)                        # (H2*W2, HW)

    # Axial depthwise tap coefficient planes.  Row n of an (N_IN, HW) feature matrix is
    # the flattened image of (b, c) with c = n % C_IN.  Both horizontal and vertical
    # boundary zeroing is baked into the masks (so rolled wrap-around reads are zeroed).
    chan_in = np.arange(N_IN) % C_IN
    p = np.arange(HW)
    w_pos, h_pos = p % W, p // W
    hcoef = np.zeros((KLEN, N_IN, HW), f32)
    vcoef = np.zeros((KLEN, N_IN, HW), f32)
    for t in range(KLEN):
        off = t - PAD
        mask_h = ((w_pos + off >= 0) & (w_pos + off < W)).astype(f32)
        mask_v = ((h_pos + off >= 0) & (h_pos + off < H)).astype(f32)
        hcoef[t] = DW_H_W[chan_in, t][:, None] * mask_h[None, :]
        vcoef[t] = DW_V_W[chan_in, t][:, None] * mask_v[None, :]

    big = np.concatenate(
        [uk_t, hcoef.reshape(KLEN * N_IN, HW), vcoef.reshape(KLEN * N_IN, HW)], axis=0)
    assert big.shape == (BIG_ROWS, HW)

    # fused conv1: one (N_IN, 2*N_IN) block-diag weight acting on stacked [skip; up]
    w1cat = np.concatenate([np.kron(eyeB, CONV1_W[:, :C_IN]),
                            np.kron(eyeB, CONV1_W[:, C_IN:])], axis=1).astype(f32)
    wpw_blk = np.kron(eyeB, PW_W).astype(f32)                     # (N_OUT, N_IN)
    chan_out = np.arange(N_OUT) % C_OUT
    mavg = (chan_out[:, None] == chan_out[None, :]).astype(f32) / B   # batch-mean matrix
    mca1 = np.kron(eyeB, np.ones((C_OUT, 1), f32) @ CA_L1).astype(f32)  # CALayer 1st linear
    w2_blk = np.kron(eyeB, CONV2_W).astype(f32)                   # (N_OUT, N_OUT)

    bias = np.zeros((N_OUT, 8), f32)
    bias[:, C_BPW] = np.tile(PW_B, B)
    bias[:, C_BNW] = (1.0 - RATIO) * BN_W[chan_out]               # 0.3*bnw folded
    bias[:, C_BNB] = (1.0 - RATIO) * BN_B[chan_out]               # 0.3*bnb folded
    bias[:, C_L2] = np.tile(CA_L2[:, 0], B)
    bias[:, C_B2] = np.tile(CONV2_B, B)
    bias[:N_IN, C_B1] = np.tile(CONV1_B, B)
    bias[:N_IN, C_BHV] = (DW_H_B + DW_V_B)[chan_in]

    wslab = np.zeros((WSLAB_ROWS, N_OUT), f32)
    wslab[R_MAVG:R_MAVG + N_OUT, :N_OUT] = mavg
    wslab[R_MCA1:R_MCA1 + N_OUT, :N_OUT] = mca1
    wslab[R_W2:R_W2 + N_OUT, :N_OUT] = w2_blk
    wslab[R_WPW:R_WPW + N_OUT, :N_IN] = wpw_blk
    wslab[R_W1:R_W1 + N_IN, :2 * N_IN] = w1cat
    wslab[R_BIAS:R_BIAS + N_OUT, :8] = bias

    return jnp.asarray(big), jnp.asarray(wslab)


_BIG, _WSLAB = _derived_operands()


# ------------------------------ fused kernel --------------------------------
def _shallow_decoder_kernel(skip_ref, x_ref, big_ref, wb_ref, out_ref):
    f32 = jnp.float32
    # constant ones/HW column: lane reductions become MXU dots (MXU is otherwise idle)
    inv_hw = jnp.full((HW, 1), 1.0 / HW, dtype=f32)

    # --- bias columns (static ref slices: free) -------------------------------
    bpw = wb_ref[R_BIAS:R_BIAS + N_OUT, C_BPW:C_BPW + 1]
    bnw3 = wb_ref[R_BIAS:R_BIAS + N_OUT, C_BNW:C_BNW + 1]
    bnb3 = wb_ref[R_BIAS:R_BIAS + N_OUT, C_BNB:C_BNB + 1]
    l2c = wb_ref[R_BIAS:R_BIAS + N_OUT, C_L2:C_L2 + 1]
    b2c = wb_ref[R_BIAS:R_BIAS + N_OUT, C_B2:C_B2 + 1]
    b1c = wb_ref[R_BIAS:R_BIAS + N_IN, C_B1:C_B1 + 1]
    bhvc = wb_ref[R_BIAS:R_BIAS + N_IN, C_BHV:C_BHV + 1]

    # ---- 1. bilinear upsample (align_corners=True): one MXU matmul ----------
    up = jnp.dot(x_ref[...], big_ref[R_UK:R_UK + H2 * W2, :],
                 preferred_element_type=f32)                            # (N_IN, HW)

    # ---- 2. conv1: single fused block-diag 1x1 on stacked [skip; up] --------
    cat = jnp.concatenate([skip_ref[...], up], axis=0)                  # (2*N_IN, HW)
    y1 = jnp.dot(wb_ref[R_W1:R_W1 + N_IN, 0:2 * N_IN], cat,
                 preferred_element_type=f32) + b1c                      # (N_IN, HW)

    # ---- 3. axial depthwise conv + residual + ReLU ---------------------------
    # Each tap = XLU roll of register-resident y1 times a precomputed per-tap
    # coefficient*boundary-mask plane (masks also kill roll wrap-around reads).
    acc_h = big_ref[R_HC + N_IN * PAD:R_HC + N_IN * (PAD + 1), :] * y1  # center taps
    acc_v = big_ref[R_VC + N_IN * PAD:R_VC + N_IN * (PAD + 1), :] * y1
    for t in range(KLEN):
        off = t - PAD
        if off == 0:
            continue
        sh = pltpu.roll(y1, shift=(-off) % HW, axis=1)       # sh[p] = y1[p + off]
        sv = pltpu.roll(y1, shift=(-off * W) % HW, axis=1)   # sv[p] = y1[p + off*W]
        acc_h = acc_h + big_ref[R_HC + N_IN * t:R_HC + N_IN * (t + 1), :] * sh
        acc_v = acc_v + big_ref[R_VC + N_IN * t:R_VC + N_IN * (t + 1), :] * sv
    pre = jnp.maximum((y1 + bhvc) + (acc_h + acc_v), 0.0)

    # ---- 4. pointwise 1x1: C_IN -> C_OUT -------------------------------------
    pw = jnp.dot(wb_ref[R_WPW:R_WPW + N_OUT, 0:N_IN], pre,
                 preferred_element_type=f32) + bpw                      # (N_OUT, HW)

    # ---- 5. hybrid norm: 0.7*InstanceNorm + 0.3*BatchNorm (blend folded) -----
    mi = jnp.dot(pw, inv_hw, preferred_element_type=f32)                # per-(b,c) mean
    xc = pw - mi
    vi = jnp.dot(xc * xc, inv_hw, preferred_element_type=f32)           # biased variance
    mavg = wb_ref[R_MAVG:R_MAVG + N_OUT, 0:N_OUT]
    mb = jnp.dot(mavg, mi, preferred_element_type=f32)                  # batch mean
    dm = mi - mb
    vb = jnp.dot(mavg, vi + dm * dm, preferred_element_type=f32)        # batch variance
    normed = (xc * (RATIO * lax.rsqrt(vi + EPS))
              + (pw - mb) * (bnw3 * lax.rsqrt(vb + EPS))
              + bnb3)

    # ---- 6. CALayer: GAP -> 1-unit MLP -> exact sigmoid gate -----------------
    gap = jnp.dot(normed, inv_hw, preferred_element_type=f32)           # (N_OUT, 1)
    hidden = jnp.maximum(
        jnp.dot(wb_ref[R_MCA1:R_MCA1 + N_OUT, 0:N_OUT], gap,
                preferred_element_type=f32), 0.0)
    gate = 0.5 * jnp.tanh(0.5 * (l2c * hidden)) + 0.5                   # exact sigmoid (EUP)
    att = normed * gate

    # ---- 7. conv2(relu(.)) then final ReLU ------------------------------------
    y = jnp.dot(wb_ref[R_W2:R_W2 + N_OUT, 0:N_OUT], jnp.maximum(att, 0.0),
                preferred_element_type=f32) + b2c
    out_ref[...] = jnp.maximum(y, 0.0)


# -------------------------------- wrapper ------------------------------------
@jax.jit
def shallow_decoder_block(skip, x):
    """skip: (B, C_IN, H, W) f32 ; x: (B, C_IN, H//2, W//2) f32 -> (B, C_OUT, H, W)."""
    skip_flat = skip.reshape(N_IN, HW)          # free row-major layout glue
    x_flat = x.reshape(N_IN, H2 * W2)
    out_flat = pl.pallas_call(
        _shallow_decoder_kernel,
        out_shape=jax.ShapeDtypeStruct((N_OUT, HW), jnp.float32),
    )(skip_flat, x_flat, _BIG, _WSLAB)
    return out_flat.reshape(B, C_OUT, H, W)


# --------------------------- pure-JAX reference ------------------------------
@jax.jit
def _reference(skip, x):
    hp = lax.Precision.HIGHEST
    uh = jnp.asarray(U_H.astype(np.float32))
    uw = jnp.asarray(U_W.astype(np.float32))
    up = jnp.einsum('hi,bcij,wj->bchw', uh, x, uw, precision=hp)
    cat = jnp.concatenate([skip, up], axis=1)
    y1 = jnp.einsum('oc,bchw->bohw', jnp.asarray(CONV1_W), cat, precision=hp) \
        + jnp.asarray(CONV1_B)[None, :, None, None]
    h = lax.conv_general_dilated(
        y1, jnp.asarray(DW_H_W).reshape(C_IN, 1, 1, KLEN), (1, 1), ((0, 0), (PAD, PAD)),
        dimension_numbers=('NCHW', 'OIHW', 'NCHW'), feature_group_count=C_IN,
        precision=hp) + jnp.asarray(DW_H_B)[None, :, None, None]
    v = lax.conv_general_dilated(
        y1, jnp.asarray(DW_V_W).reshape(C_IN, 1, KLEN, 1), (1, 1), ((PAD, PAD), (0, 0)),
        dimension_numbers=('NCHW', 'OIHW', 'NCHW'), feature_group_count=C_IN,
        precision=hp) + jnp.asarray(DW_V_B)[None, :, None, None]
    pre = jnp.maximum(h + v + y1, 0.0)
    pw = jnp.einsum('oc,bchw->bohw', jnp.asarray(PW_W), pre, precision=hp) \
        + jnp.asarray(PW_B)[None, :, None, None]
    mi = jnp.mean(pw, axis=(2, 3), keepdims=True)
    vi = jnp.mean((pw - mi) ** 2, axis=(2, 3), keepdims=True)
    in_n = (pw - mi) * lax.rsqrt(vi + EPS)
    mb = jnp.mean(pw, axis=(0, 2, 3), keepdims=True)
    vb = jnp.mean((pw - mb) ** 2, axis=(0, 2, 3), keepdims=True)
    bn_n = (pw - mb) * lax.rsqrt(vb + EPS) * jnp.asarray(BN_W)[None, :, None, None] \
        + jnp.asarray(BN_B)[None, :, None, None]
    normed = RATIO * in_n + (1.0 - RATIO) * bn_n
    gap = jnp.mean(normed, axis=(2, 3))                                 # (B, C_OUT)
    hidden = jnp.maximum(gap @ jnp.asarray(CA_L1).T, 0.0)               # (B, C_RED)
    gate = jax.nn.sigmoid(hidden @ jnp.asarray(CA_L2).T)                # (B, C_OUT)
    att = normed * gate[:, :, None, None]
    y = jnp.einsum('oc,bchw->bohw', jnp.asarray(CONV2_W), jnp.maximum(att, 0.0),
                   precision=hp) + jnp.asarray(CONV2_B)[None, :, None, None]
    return jnp.maximum(y, 0.0)


if __name__ == "__main__":
    key = jax.random.PRNGKey(0)
    k1, k2 = jax.random.split(key)
    skip = jax.random.normal(k1, (B, C_IN, H, W), dtype=jnp.float32)
    x = jax.random.normal(k2, (B, C_IN, H2, W2), dtype=jnp.float32)

    out = shallow_decoder_block(skip, x)
    jax.block_until_ready(out)
    assert out.shape == (B, C_OUT, H, W)
    assert bool(jnp.all(jnp.isfinite(out)))

    # correctness check against the pure-JAX/XLA reference (same parameters);
    # 5e-3 is tight enough to catch any structural bug while tolerating MXU/EUP rounding.
    ref = _reference(skip, x)
    err = float(jnp.max(jnp.abs(out - ref)))
    assert err < 5e-3, f"max abs err {err}"

    print("KERNEL_OK")
</pallas_src>

<mosaic_0001>
module attributes {stable_mosaic.version = 11 : i64} {
  func.func @_shallow_decoder_kernel(%arg0: memref<8x256xf32, #tpu.memory_space<vmem>>, %arg1: memref<8x64xf32, #tpu.memory_space<vmem>>, %arg2: memref<144x256xf32, #tpu.memory_space<vmem>>, %arg3: memref<168x32xf32, #tpu.memory_space<vmem>>, %arg4: memref<32x256xf32, #tpu.memory_space<vmem>>) attributes {dimension_semantics = [], scalar_prefetch = 0 : i64, scratch_operands = 0 : i64, tpu.core_type = #tpu.core_type<tc>} {
    %cst = arith.constant 3.906250e-03 : f32
    %0 = vector.broadcast %cst : f32 to vector<256x1xf32>
    %c136 = arith.constant 136 : index
    %c0 = arith.constant 0 : index
    %1 = vector.load %arg3[%c136, %c0] : memref<168x32xf32, #tpu.memory_space<vmem>>, vector<32x1xf32>
    %c136_0 = arith.constant 136 : index
    %c1 = arith.constant 1 : index
    %2 = vector.load %arg3[%c136_0, %c1] : memref<168x32xf32, #tpu.memory_space<vmem>>, vector<32x1xf32>
    %c136_1 = arith.constant 136 : index
    %c2 = arith.constant 2 : index
    %3 = vector.load %arg3[%c136_1, %c2] : memref<168x32xf32, #tpu.memory_space<vmem>>, vector<32x1xf32>
    %c136_2 = arith.constant 136 : index
    %c3 = arith.constant 3 : index
    %4 = vector.load %arg3[%c136_2, %c3] : memref<168x32xf32, #tpu.memory_space<vmem>>, vector<32x1xf32>
    %c136_3 = arith.constant 136 : index
    %c4 = arith.constant 4 : index
    %5 = vector.load %arg3[%c136_3, %c4] : memref<168x32xf32, #tpu.memory_space<vmem>>, vector<32x1xf32>
    %c136_4 = arith.constant 136 : index
    %c5 = arith.constant 5 : index
    %6 = vector.load %arg3[%c136_4, %c5] : memref<168x32xf32, #tpu.memory_space<vmem>>, vector<8x1xf32>
    %c136_5 = arith.constant 136 : index
    %c6 = arith.constant 6 : index
    %7 = vector.load %arg3[%c136_5, %c6] : memref<168x32xf32, #tpu.memory_space<vmem>>, vector<8x1xf32>
    %c0_6 = arith.constant 0 : index
    %c0_7 = arith.constant 0 : index
    %8 = vector.load %arg1[%c0_6, %c0_7] : memref<8x64xf32, #tpu.memory_space<vmem>>, vector<8x64xf32>
    %c0_8 = arith.constant 0 : index
    %c0_9 = arith.constant 0 : index
    %9 = vector.load %arg2[%c0_8, %c0_9] : memref<144x256xf32, #tpu.memory_space<vmem>>, vector<64x256xf32>
    %cst_10 = arith.constant dense<0.000000e+00> : vector<8x256xf32>
    %10 = tpu.matmul %8, %9, %cst_10 {dimension_numbers = #tpu.dot_dimension_numbers<[1], [0], [0], [1], [0, 0, 1, 1], [], []>} : vector<8x64xf32>, vector<64x256xf32>, vector<8x256xf32> -> vector<8x256xf32>
    %c0_11 = arith.constant 0 : index
    %c0_12 = arith.constant 0 : index
    %11 = vector.load %arg0[%c0_11, %c0_12] : memref<8x256xf32, #tpu.memory_space<vmem>>, vector<8x256xf32>
    %12 = tpu.concatenate %11, %10 in 0 : vector<8x256xf32>, vector<8x256xf32> -> vector<16x256xf32>
    %c128 = arith.constant 128 : index
    %c0_13 = arith.constant 0 : index
    %13 = vector.load %arg3[%c128, %c0_13] : memref<168x32xf32, #tpu.memory_space<vmem>>, vector<8x16xf32>
    %cst_14 = arith.constant dense<0.000000e+00> : vector<8x256xf32>
    %14 = tpu.matmul %13, %12, %cst_14 {dimension_numbers = #tpu.dot_dimension_numbers<[1], [0], [0], [1], [0, 0, 1, 1], [], []>} : vector<8x16xf32>, vector<16x256xf32>, vector<8x256xf32> -> vector<8x256xf32>
    %15 = vector.broadcast %6 : vector<8x1xf32> to vector<8x256xf32>
    %16 = arith.addf %14, %15 : vector<8x256xf32>
    %c80 = arith.constant 80 : index
    %c0_15 = arith.constant 0 : index
    %17 = vector.load %arg2[%c80, %c0_15] : memref<144x256xf32, #tpu.memory_space<vmem>>, vector<8x256xf32>
    %18 = arith.mulf %17, %16 : vector<8x256xf32>
    %c120 = arith.constant 120 : index
    %c0_16 = arith.constant 0 : index
    %19 = vector.load %arg2[%c120, %c0_16] : memref<144x256xf32, #tpu.memory_space<vmem>>, vector<8x256xf32>
    %20 = arith.mulf %19, %16 : vector<8x256xf32>
    %c2_i32 = arith.constant 2 : i32
    %21 = tpu.dynamic_rotate %16 by %c2_i32 dim 1 : vector<8x256xf32>, i32 -> vector<8x256xf32>
    %c32_i32 = arith.constant 32 : i32
    %22 = tpu.dynamic_rotate %16 by %c32_i32 dim 1 : vector<8x256xf32>, i32 -> vector<8x256xf32>
    %c64 = arith.constant 64 : index
    %c0_17 = arith.constant 0 : index
    %23 = vector.load %arg2[%c64, %c0_17] : memref<144x256xf32, #tpu.memory_space<vmem>>, vector<8x256xf32>
    %24 = arith.mulf %23, %21 : vector<8x256xf32>
    %25 = arith.addf %18, %24 : vector<8x256xf32>
    %c104 = arith.constant 104 : index
    %c0_18 = arith.constant 0 : index
    %26 = vector.load %arg2[%c104, %c0_18] : memref<144x256xf32, #tpu.memory_space<vmem>>, vector<8x256xf32>
    %27 = arith.mulf %26, %22 : vector<8x256xf32>
    %28 = arith.addf %20, %27 : vector<8x256xf32>
    %c1_i32 = arith.constant 1 : i32
    %29 = tpu.dynamic_rotate %16 by %c1_i32 dim 1 : vector<8x256xf32>, i32 -> vector<8x256xf32>
    %c16_i32 = arith.constant 16 : i32
    %30 = tpu.dynamic_rotate %16 by %c16_i32 dim 1 : vector<8x256xf32>, i32 -> vector<8x256xf32>
    %c72 = arith.constant 72 : index
    %c0_19 = arith.constant 0 : index
    %31 = vector.load %arg2[%c72, %c0_19] : memref<144x256xf32, #tpu.memory_space<vmem>>, vector<8x256xf32>
    %32 = arith.mulf %31, %29 : vector<8x256xf32>
    %33 = arith.addf %25, %32 : vector<8x256xf32>
    %c112 = arith.constant 112 : index
    %c0_20 = arith.constant 0 : index
    %34 = vector.load %arg2[%c112, %c0_20] : memref<144x256xf32, #tpu.memory_space<vmem>>, vector<8x256xf32>
    %35 = arith.mulf %34, %30 : vector<8x256xf32>
    %36 = arith.addf %28, %35 : vector<8x256xf32>
    %c255_i32 = arith.constant 255 : i32
    %37 = tpu.dynamic_rotate %16 by %c255_i32 dim 1 : vector<8x256xf32>, i32 -> vector<8x256xf32>
    %c240_i32 = arith.constant 240 : i32
    %38 = tpu.dynamic_rotate %16 by %c240_i32 dim 1 : vector<8x256xf32>, i32 -> vector<8x256xf32>
    %c88 = arith.constant 88 : index
    %c0_21 = arith.constant 0 : index
    %39 = vector.load %arg2[%c88, %c0_21] : memref<144x256xf32, #tpu.memory_space<vmem>>, vector<8x256xf32>
    %40 = arith.mulf %39, %37 : vector<8x256xf32>
    %41 = arith.addf %33, %40 : vector<8x256xf32>
    %c128_22 = arith.constant 128 : index
    %c0_23 = arith.constant 0 : index
    %42 = vector.load %arg2[%c128_22, %c0_23] : memref<144x256xf32, #tpu.memory_space<vmem>>, vector<8x256xf32>
    %43 = arith.mulf %42, %38 : vector<8x256xf32>
    %44 = arith.addf %36, %43 : vector<8x256xf32>
    %c254_i32 = arith.constant 254 : i32
    %45 = tpu.dynamic_rotate %16 by %c254_i32 dim 1 : vector<8x256xf32>, i32 -> vector<8x256xf32>
    %c224_i32 = arith.constant 224 : i32
    %46 = tpu.dynamic_rotate %16 by %c224_i32 dim 1 : vector<8x256xf32>, i32 -> vector<8x256xf32>
    %c96 = arith.constant 96 : index
    %c0_24 = arith.constant 0 : index
    %47 = vector.load %arg2[%c96, %c0_24] : memref<144x256xf32, #tpu.memory_space<vmem>>, vector<8x256xf32>
    %48 = arith.mulf %47, %45 : vector<8x256xf32>
    %49 = arith.addf %41, %48 : vector<8x256xf32>
    %c136_25 = arith.constant 136 : index
    %c0_26 = arith.constant 0 : index
    %50 = vector.load %arg2[%c136_25, %c0_26] : memref<144x256xf32, #tpu.memory_space<vmem>>, vector<8x256xf32>
    %51 = arith.mulf %50, %46 : vector<8x256xf32>
    %52 = arith.addf %44, %51 : vector<8x256xf32>
    %53 = vector.broadcast %7 : vector<8x1xf32> to vector<8x256xf32>
    %54 = arith.addf %16, %53 : vector<8x256xf32>
    %55 = arith.addf %49, %52 : vector<8x256xf32>
    %56 = arith.addf %54, %55 : vector<8x256xf32>
    %cst_27 = arith.constant 0.000000e+00 : f32
    %57 = vector.broadcast %cst_27 : f32 to vector<8x256xf32>
    %58 = arith.maximumf %56, %57 : vector<8x256xf32>
    %c96_28 = arith.constant 96 : index
    %c0_29 = arith.constant 0 : index
    %59 = vector.load %arg3[%c96_28, %c0_29] : memref<168x32xf32, #tpu.memory_space<vmem>>, vector<32x8xf32>
    %cst_30 = arith.constant dense<0.000000e+00> : vector<32x256xf32>
    %60 = tpu.matmul %59, %58, %cst_30 {dimension_numbers = #tpu.dot_dimension_numbers<[1], [0], [0], [1], [0, 0, 1, 1], [], []>} : vector<32x8xf32>, vector<8x256xf32>, vector<32x256xf32> -> vector<32x256xf32>
    %61 = vector.broadcast %1 : vector<32x1xf32> to vector<32x256xf32>
    %62 = arith.addf %60, %61 : vector<32x256xf32>
    %cst_31 = arith.constant dense<0.000000e+00> : vector<32x1xf32>
    %63 = tpu.matmul %62, %0, %cst_31 {dimension_numbers = #tpu.dot_dimension_numbers<[1], [0], [0], [1], [0, 0, 1, 1], [], []>} : vector<32x256xf32>, vector<256x1xf32>, vector<32x1xf32> -> vector<32x1xf32>
    %64 = vector.broadcast %63 : vector<32x1xf32> to vector<32x256xf32>
    %65 = arith.subf %62, %64 : vector<32x256xf32>
    %66 = arith.mulf %65, %65 : vector<32x256xf32>
    %cst_32 = arith.constant dense<0.000000e+00> : vector<32x1xf32>
    %67 = tpu.matmul %66, %0, %cst_32 {dimension_numbers = #tpu.dot_dimension_numbers<[1], [0], [0], [1], [0, 0, 1, 1], [], []>} : vector<32x256xf32>, vector<256x1xf32>, vector<32x1xf32> -> vector<32x1xf32>
    %c0_33 = arith.constant 0 : index
    %c0_34 = arith.constant 0 : index
    %68 = vector.load %arg3[%c0_33, %c0_34] : memref<168x32xf32, #tpu.memory_space<vmem>>, vector<32x32xf32>
    %cst_35 = arith.constant dense<0.000000e+00> : vector<32x1xf32>
    %69 = tpu.matmul %68, %63, %cst_35 {dimension_numbers = #tpu.dot_dimension_numbers<[1], [0], [0], [1], [0, 0, 1, 1], [], []>} : vector<32x32xf32>, vector<32x1xf32>, vector<32x1xf32> -> vector<32x1xf32>
    %70 = arith.subf %63, %69 : vector<32x1xf32>
    %71 = arith.mulf %70, %70 : vector<32x1xf32>
    %72 = arith.addf %67, %71 : vector<32x1xf32>
    %cst_36 = arith.constant dense<0.000000e+00> : vector<32x1xf32>
    %73 = tpu.matmul %68, %72, %cst_36 {dimension_numbers = #tpu.dot_dimension_numbers<[1], [0], [0], [1], [0, 0, 1, 1], [], []>} : vector<32x32xf32>, vector<32x1xf32>, vector<32x1xf32> -> vector<32x1xf32>
    %cst_37 = arith.constant 9.99999974E-6 : f32
    %74 = vector.broadcast %cst_37 : f32 to vector<32x1xf32>
    %75 = arith.addf %67, %74 : vector<32x1xf32>
    %76 = math.rsqrt %75 : vector<32x1xf32>
    %cst_38 = arith.constant 0.699999988 : f32
    %77 = vector.broadcast %cst_38 : f32 to vector<32x1xf32>
    %78 = arith.mulf %77, %76 : vector<32x1xf32>
    %79 = vector.broadcast %78 : vector<32x1xf32> to vector<32x256xf32>
    %80 = arith.mulf %65, %79 : vector<32x256xf32>
    %81 = vector.broadcast %69 : vector<32x1xf32> to vector<32x256xf32>
    %82 = arith.subf %62, %81 : vector<32x256xf32>
    %cst_39 = arith.constant 9.99999974E-6 : f32
    %83 = vector.broadcast %cst_39 : f32 to vector<32x1xf32>
    %84 = arith.addf %73, %83 : vector<32x1xf32>
    %85 = math.rsqrt %84 : vector<32x1xf32>
    %86 = arith.mulf %2, %85 : vector<32x1xf32>
    %87 = vector.broadcast %86 : vector<32x1xf32> to vector<32x256xf32>
    %88 = arith.mulf %82, %87 : vector<32x256xf32>
    %89 = arith.addf %80, %88 : vector<32x256xf32>
    %90 = vector.broadcast %3 : vector<32x1xf32> to vector<32x256xf32>
    %91 = arith.addf %89, %90 : vector<32x256xf32>
    %cst_40 = arith.constant dense<0.000000e+00> : vector<32x1xf32>
    %92 = tpu.matmul %91, %0, %cst_40 {dimension_numbers = #tpu.dot_dimension_numbers<[1], [0], [0], [1], [0, 0, 1, 1], [], []>} : vector<32x256xf32>, vector<256x1xf32>, vector<32x1xf32> -> vector<32x1xf32>
    %c32 = arith.constant 32 : index
    %c0_41 = arith.constant 0 : index
    %93 = vector.load %arg3[%c32, %c0_41] : memref<168x32xf32, #tpu.memory_space<vmem>>, vector<32x32xf32>
    %cst_42 = arith.constant dense<0.000000e+00> : vector<32x1xf32>
    %94 = tpu.matmul %93, %92, %cst_42 {dimension_numbers = #tpu.dot_dimension_numbers<[1], [0], [0], [1], [0, 0, 1, 1], [], []>} : vector<32x32xf32>, vector<32x1xf32>, vector<32x1xf32> -> vector<32x1xf32>
    %cst_43 = arith.constant 0.000000e+00 : f32
    %95 = vector.broadcast %cst_43 : f32 to vector<32x1xf32>
    %96 = arith.maximumf %94, %95 : vector<32x1xf32>
    %97 = arith.mulf %4, %96 : vector<32x1xf32>
    %cst_44 = arith.constant 5.000000e-01 : f32
    %98 = vector.broadcast %cst_44 : f32 to vector<32x1xf32>
    %99 = arith.mulf %98, %97 : vector<32x1xf32>
    %100 = math.tanh %99 : vector<32x1xf32>
    %cst_45 = arith.constant 5.000000e-01 : f32
    %101 = vector.broadcast %cst_45 : f32 to vector<32x1xf32>
    %102 = arith.mulf %101, %100 : vector<32x1xf32>
    %cst_46 = arith.constant 5.000000e-01 : f32
    %103 = vector.broadcast %cst_46 : f32 to vector<32x1xf32>
    %104 = arith.addf %102, %103 : vector<32x1xf32>
    %105 = vector.broadcast %104 : vector<32x1xf32> to vector<32x256xf32>
    %106 = arith.mulf %91, %105 : vector<32x256xf32>
    %c64_47 = arith.constant 64 : index
    %c0_48 = arith.constant 0 : index
    %107 = vector.load %arg3[%c64_47, %c0_48] : memref<168x32xf32, #tpu.memory_space<vmem>>, vector<32x32xf32>
    %cst_49 = arith.constant 0.000000e+00 : f32
    %108 = vector.broadcast %cst_49 : f32 to vector<32x256xf32>
    %109 = arith.maximumf %106, %108 : vector<32x256xf32>
    %cst_50 = arith.constant dense<0.000000e+00> : vector<32x256xf32>
    %110 = tpu.matmul %107, %109, %cst_50 {dimension_numbers = #tpu.dot_dimension_numbers<[1], [0], [0], [1], [0, 0, 1, 1], [], []>} : vector<32x32xf32>, vector<32x256xf32>, vector<32x256xf32> -> vector<32x256xf32>
    %111 = vector.broadcast %5 : vector<32x1xf32> to vector<32x256xf32>
    %112 = arith.addf %110, %111 : vector<32x256xf32>
    %cst_51 = arith.constant 0.000000e+00 : f32
    %113 = vector.broadcast %cst_51 : f32 to vector<32x256xf32>
    %114 = arith.maximumf %112, %113 : vector<32x256xf32>
    %c0_52 = arith.constant 0 : index
    %c0_53 = arith.constant 0 : index
    %115 = vector.load %arg4[%c0_52, %c0_53] : memref<32x256xf32, #tpu.memory_space<vmem>>, vector<32x256xf32>
    tpu.vector_store %arg4[%c0_52, %c0_53], %114 {strides = array<i32>} : memref<32x256xf32, #tpu.memory_space<vmem>>, vector<32x256xf32>,
    return
  }
}

</mosaic_0001>

<llo_original>
// kernel: shallow_decoder_block.1
$region0: #{shallow_decoder_block.1}
  #allocation0 [shape = 'u32[]', space=smem, size = 0x4, offset = 0x4, fixed_abs, tag = 'smem constant byte address 0x4 - core index']
  #allocation1 [shape = 'u32[144,128]{1,0:T(1,128)}', space=vmem, size = 0x12000, scoped, tag = 'internal scratch']
  %s0 = inlined_call_operand.vmem [shape: f32[8,256], index: 0, kind: input, shape index: {}]
  %s1 = inlined_call_operand.vmem [shape: f32[8,64], index: 1, kind: input, shape index: {}]
  %s2 = inlined_call_operand.hbm [shape: f32[144,256], index: 2, kind: input, shape index: {}]
  %s3 = inlined_call_operand.vmem [shape: f32[168,32], index: 3, kind: input, shape index: {}]
  %s4 = inlined_call_operand.vmem [shape: f32[32,256], index: 4, kind: output, shape index: {}]
  %s5 = sld [smem:[#allocation0]]
  $region30: #{shallow_decoder_block.1} parent=0
    _
  %s7 = ssub.s32 1, %s5
  %s8 = scalar_select 0, %s7, %s5
  $region1: #{shallow_decoder_block.1} parent=0
    #allocation2 [shape = 'u8[147456]{0}', space=vmem, size = 0x24000, scoped, tag = 'input window, operand 2, single buffered']
    #allocation3 [shape = 's32[1]{0}', space=sflag, size = 0x4, scoped, tag = 'scoped memory for shallow_decoder_block.1']
    %9 = vsyncpa [#allocation3], 0
    // Predicated region
    $region2: #{shallow_decoder_block.1} parent=1 // pred_check
      _
    $region3: #{shallow_decoder_block.1} parent=1 // pred_check_branch
      %11 = sbr.rel (0) target = $region5
    $region4: #{shallow_decoder_block.1} parent=1 // pred_region
      _
    $region5: #{shallow_decoder_block.1} parent=1 // pred_fallthru
      _
    // Predicated region
    $region6: #{shallow_decoder_block.1} parent=1 // pred_check
      _
    $region7: #{shallow_decoder_block.1} parent=1 // pred_check_branch
      %13 = sbr.rel (0) target = $region9
    $region8: #{shallow_decoder_block.1} parent=1 // pred_region
      _
    $region9: #{shallow_decoder_block.1} parent=1 // pred_fallthru
      _
    // Predicated region
    $region10: #{shallow_decoder_block.1} parent=1 // pred_check
      _
    $region11: #{shallow_decoder_block.1} parent=1 // pred_check_branch
      %15 = sbr.rel (0) target = $region13
    $region12: #{shallow_decoder_block.1} parent=1 // pred_region
      %s17 = ssub.s32 4608, 4608
      %18 = vsyncadd [#allocation3], %s17
      %s19 = sshll.u32 [#allocation2], 4
      %s20 = int_to_ptr.vmem [resolvable:$true] %s19
      %25 = dma.hbm_to_vmem [thread:$0]  %s2, 4608, %s20, [#allocation3], 256, 256, 16
    $region13: #{shallow_decoder_block.1} parent=1 // pred_fallthru
      _
    // Predicated region
    $region14: #{shallow_decoder_block.1} parent=1 // pred_check
      _
    $region15: #{shallow_decoder_block.1} parent=1 // pred_check_branch
      %27 = sbr.rel (0) target = $region17
    $region16: #{shallow_decoder_block.1} parent=1 // pred_region
      _
    $region17: #{shallow_decoder_block.1} parent=1 // pred_fallthru
      _
    // Predicated region
    $region18: #{shallow_decoder_block.1} parent=1 // pred_check
      _
    $region19: #{shallow_decoder_block.1} parent=1 // pred_check_branch
      %29 = sbr.rel (0) target = $region21
    $region20: #{shallow_decoder_block.1} parent=1 // pred_region
      %30 = dma.done [#allocation3], 4608
    $region21: #{shallow_decoder_block.1} parent=1 // pred_fallthru
      _
    %v31 = vld [vmem:[%s3 + $0x88] sm:$0xff]
    %v32 = vld [vmem:[%s3 + $0x90] sm:$0xff]
    %v33 = vld [vmem:[%s3 + $0x98] sm:$0xff]
    %v34 = vld [vmem:[%s3 + $0xa0] sm:$0xff]
    %v35 = vld [vmem:[%s1] sm:$0xff]
    %v36 = vld [vmem:[#allocation2] sm:$0xff]
    %v37 = vld [vmem:[#allocation2 + $0x8] sm:$0xff]
    %v38 = vld [vmem:[#allocation2 + $0x10] sm:$0xff]
    %v39 = vld [vmem:[#allocation2 + $0x18] sm:$0xff]
    %v40 = vld [vmem:[#allocation2 + $0x20] sm:$0xff]
    %v41 = vld [vmem:[#allocation2 + $0x28] sm:$0xff]
    %v42 = vld [vmem:[#allocation2 + $0x30] sm:$0xff]
    %v43 = vld [vmem:[#allocation2 + $0x38] sm:$0xff]
    %v44 = vld [vmem:[#allocation2 + $0x40] sm:$0xff]
    %v45 = vld [vmem:[#allocation2 + $0x48] sm:$0xff]
    %v46 = vld [vmem:[#allocation2 + $0x50] sm:$0xff]
    %v47 = vld [vmem:[#allocation2 + $0x58] sm:$0xff]
    %v48 = vld [vmem:[#allocation2 + $0x60] sm:$0xff]
    %v49 = vld [vmem:[#allocation2 + $0x68] sm:$0xff]
    %v50 = vld [vmem:[#allocation2 + $0x70] sm:$0xff]
    %v51 = vld [vmem:[#allocation2 + $0x78] sm:$0xff]
    %vm52 = vcmask 523264
    %v54 = vsel %vm52, %v35, 0
    %56 = vmatprep.subr.mxu0 %v37
    %57 = vmatpush1.msra.mxu0 %v36
    %58 = vmatprep.subr.mxu0 %v39
    %59 = vmatpush1.msra.mxu0 %v38
    %60 = vmatprep.subr.mxu0 %v41
    %61 = vmatpush1.msra.mxu0 %v40
    %62 = vmatprep.subr.mxu0 %v43
    %63 = vmatpush1.msra.mxu0 %v42
    %64 = vmatprep.subr.mxu0 %v45
    %65 = vmatpush1.msra.mxu0 %v44
    %66 = vmatprep.subr.mxu0 %v47
    %67 = vmatpush1.msra.mxu0 %v46
    %68 = vmatprep.subr.mxu0 %v49
    %69 = vmatpush1.msra.mxu0 %v48
    %70 = vmatprep.subr.mxu0 %v51
    %71 = vmatpush1.msra.mxu0 %v50
    %72 = vmatprep.subr.mxu0 0.0
    %73 = vmatpush1.msra.mxu0 0.0
    %74 = vmatprep.subr.mxu0 0.0
    %75 = vmatpush1.msra.mxu0 0.0
    %76 = vmatprep.subr.mxu0 0.0
    %77 = vmatpush1.msra.mxu0 0.0
    %78 = vmatprep.subr.mxu0 0.0
    %79 = vmatpush1.msra.mxu0 0.0
    %80 = vmatprep.subr.mxu0 0.0
    %81 = vmatpush1.msra.mxu0 0.0
    %82 = vmatprep.subr.mxu0 0.0
    %83 = vmatpush1.msra.mxu0 0.0
    %84 = vmatprep.subr.mxu0 0.0
    %85 = vmatpush1.msra.mxu0 0.0
    %86 = vmatprep.subr.mxu0 0.0
    %87 = vmatpush1.msra.mxu0 0.0
    %88 = vmatprep.subr.mxu0 0.0
    %89 = vmatpush1.msra.mxu0 0.0
    %90 = vmatprep.subr.mxu0 0.0
    %91 = vmatpush1.msra.mxu0 0.0
    %92 = vmatprep.subr.mxu0 0.0
    %93 = vmatpush1.msra.mxu0 0.0
    %94 = vmatprep.subr.mxu0 0.0
    %95 = vmatpush1.msra.mxu0 0.0
    %96 = vmatprep.subr.mxu0 0.0
    %97 = vmatpush1.msra.mxu0 0.0
    %98 = vmatprep.subr.mxu0 0.0
    %99 = vmatpush1.msra.mxu0 0.0
    %100 = vmatprep.subr.mxu0 0.0
    %101 = vmatpush1.msra.mxu0 0.0
    %102 = vmatprep.subr.mxu0 0.0
    %103 = vmatpush1.msra.mxu0 0.0
    %104 = vmatprep.subr.mxu0 0.0
    %105 = vmatpush1.msra.mxu0 0.0
    %106 = vmatprep.subr.mxu0 0.0
    %107 = vmatpush1.msra.mxu0 0.0
    %108 = vmatprep.subr.mxu0 0.0
    %109 = vmatpush1.msra.mxu0 0.0
    %110 = vmatprep.subr.mxu0 0.0
    %111 = vmatpush1.msra.mxu0 0.0
    %112 = vmatprep.subr.mxu0 0.0
    %113 = vmatpush1.msra.mxu0 0.0
    %114 = vmatprep.subr.mxu0 0.0
    %115 = vmatpush1.msra.mxu0 0.0
    %116 = vmatprep.subr.mxu0 0.0
    %117 = vmatpush1.msra.mxu0 0.0
    %118 = vmatprep.subr.mxu0 0.0
    %119 = vmatpush1.msra.mxu0 0.0
    %120 = vmatprep.mubr.f32.mxu0 0.0
    %121 = vmatmul.mubr.f32.gmra.mrb[0].mxu0 %v54
    %v122 = vpop.f32.mrb[0].mxu0
    %v123 = vadd.f32 0.0, %v122
    %v124 = vpop.f32.mrb[0].mxu0
    %v125 = vadd.f32 0.0, %v124
    %126 = vdwg.mxu0
    %v127 = vld [vmem:[%s0] sm:$0xff]
    %v128 = vld [vmem:[%s0 + $0x8] sm:$0xff]
    %v129 = vld [vmem:[%s3 + $0x80] sm:$0xff]
    %131 = vset.pattern.permute.xlu0 5
    %132 = vperm.xlu0 %131, %v31
    %v133 = vpop.permute.xlu0 %132
    %vm135 = vcmask 130048
    %v137 = vsel %vm135, %v129, 0
    %139 = vmatprep.subr.mxu0 %v128
    %140 = vmatpush1.msra.mxu0 %v127
    %141 = vmatprep.subr.mxu0 %v125
    %142 = vmatpush1.msra.mxu0 %v123
    %143 = vmatprep.subr.mxu0 0.0
    %144 = vmatpush1.msra.mxu0 0.0
    %145 = vmatprep.subr.mxu0 0.0
    %146 = vmatpush1.msra.mxu0 0.0
    %147 = vmatprep.subr.mxu0 0.0
    %148 = vmatpush1.msra.mxu0 0.0
    %149 = vmatprep.subr.mxu0 0.0
    %150 = vmatpush1.msra.mxu0 0.0
    %151 = vmatprep.subr.mxu0 0.0
    %152 = vmatpush1.msra.mxu0 0.0
    %153 = vmatprep.subr.mxu0 0.0
    %154 = vmatpush1.msra.mxu0 0.0
    %155 = vmatprep.subr.mxu0 0.0
    %156 = vmatpush1.msra.mxu0 0.0
    %157 = vmatprep.subr.mxu0 0.0
    %158 = vmatpush1.msra.mxu0 0.0
    %159 = vmatprep.subr.mxu0 0.0
    %160 = vmatpush1.msra.mxu0 0.0
    %161 = vmatprep.subr.mxu0 0.0
    %162 = vmatpush1.msra.mxu0 0.0
    %163 = vmatprep.subr.mxu0 0.0
    %164 = vmatpush1.msra.mxu0 0.0
    %165 = vmatprep.subr.mxu0 0.0
    %166 = vmatpush1.msra.mxu0 0.0
    %167 = vmatprep.subr.mxu0 0.0
    %168 = vmatpush1.msra.mxu0 0.0
    %169 = vmatprep.subr.mxu0 0.0
    %170 = vmatpush1.msra.mxu0 0.0
    %171 = vmatprep.subr.mxu0 0.0
    %172 = vmatpush1.msra.mxu0 0.0
    %173 = vmatprep.subr.mxu0 0.0
    %174 = vmatpush1.msra.mxu0 0.0
    %175 = vmatprep.subr.mxu0 0.0
    %176 = vmatpush1.msra.mxu0 0.0
    %177 = vmatprep.subr.mxu0 0.0
    %178 = vmatpush1.msra.mxu0 0.0
    %179 = vmatprep.subr.mxu0 0.0
    %180 = vmatpush1.msra.mxu0 0.0
    %181 = vmatprep.subr.mxu0 0.0
    %182 = vmatpush1.msra.mxu0 0.0
    %183 = vmatprep.subr.mxu0 0.0
    %184 = vmatpush1.msra.mxu0 0.0
    %185 = vmatprep.subr.mxu0 0.0
    %186 = vmatpush1.msra.mxu0 0.0
    %187 = vmatprep.subr.mxu0 0.0
    %188 = vmatpush1.msra.mxu0 0.0
    %189 = vmatprep.subr.mxu0 0.0
    %190 = vmatpush1.msra.mxu0 0.0
    %191 = vmatprep.subr.mxu0 0.0
    %192 = vmatpush1.msra.mxu0 0.0
    %193 = vmatprep.subr.mxu0 0.0
    %194 = vmatpush1.msra.mxu0 0.0
    %195 = vmatprep.subr.mxu0 0.0
    %196 = vmatpush1.msra.mxu0 0.0
    %197 = vmatprep.subr.mxu0 0.0
    %198 = vmatpush1.msra.mxu0 0.0
    %199 = vmatprep.subr.mxu0 0.0
    %200 = vmatpush1.msra.mxu0 0.0
    %201 = vmatprep.subr.mxu0 0.0
    %202 = vmatpush1.msra.mxu0 0.0
    %203 = vmatprep.mubr.f32.mxu0 0.0
    %204 = vmatmul.mubr.f32.gmra.mrb[0].mxu0 %v137
    %v205 = vpop.f32.mrb[0].mxu0
    %v206 = vadd.f32 %v133, %v205
    %v207 = vpop.f32.mrb[0].mxu0
    %v208 = vadd.f32 %v133, %v207
    %209 = vdwg.mxu0
    %v210 = vld [vmem:[#allocation2 + $0xa0] sm:$0xff]
    %v211 = vld [vmem:[#allocation2 + $0xa8] sm:$0xff]
    %v212 = vmul.f32 %v210, %v206
    %v213 = vmul.f32 %v211, %v208
    %v214 = vld [vmem:[#allocation2 + $0xf0] sm:$0xff]
    %v215 = vld [vmem:[#allocation2 + $0xf8] sm:$0xff]
    %v216 = vmul.f32 %v214, %v206
    %v217 = vmul.f32 %v215, %v208
    %218 = vrot.lane.b32.xlu0 %v206, 2
    %v219 = vpop.permute.xlu0 %218
    %220 = vrot.lane.b32.xlu0 %v208, 2
    %v221 = vpop.permute.xlu0 %220
    %v222 = vlaneseq
    %v223 = vand.u32 %v222, 127
    %vm224 = vcmp.lt.s32.totalorder %v223, 2
    %v225 = vsel %vm224, %v219, %v221
    %v226 = vsel %vm224, %v221, %v219
    %227 = vrot.lane.b32.xlu0 %v206, 32
    %v228 = vpop.permute.xlu0 %227
    %229 = vrot.lane.b32.xlu0 %v208, 32
    %v230 = vpop.permute.xlu0 %229
    %vm231 = vcmp.lt.s32.totalorder %v223, 32
    %v232 = vsel %vm231, %v228, %v230
    %v233 = vsel %vm231, %v230, %v228
    %v234 = vld [vmem:[#allocation2 + $0x80] sm:$0xff]
    %v235 = vld [vmem:[#allocation2 + $0x88] sm:$0xff]
    %v236 = vmul.f32 %v234, %v226
    %v237 = vmul.f32 %v235, %v225
    %v238 = vadd.f32 %v212, %v236
    %v239 = vadd.f32 %v213, %v237
    %v240 = vld [vmem:[#allocation2 + $0xd0] sm:$0xff]
    %v241 = vld [vmem:[#allocation2 + $0xd8] sm:$0xff]
    %v242 = vmul.f32 %v240, %v233
    %v243 = vmul.f32 %v241, %v232
    %v244 = vadd.f32 %v216, %v242
    %v245 = vadd.f32 %v217, %v243
    %246 = vrot.lane.b32.xlu0 %v206, 1
    %v247 = vpop.permute.xlu0 %246
    %248 = vrot.lane.b32.xlu0 %v208, 1
    %v249 = vpop.permute.xlu0 %248
    %vm250 = vcmp.lt.s32.totalorder %v223, 1
    %v251 = vsel %vm250, %v247, %v249
    %v252 = vsel %vm250, %v249, %v247
    %253 = vrot.lane.b32.xlu0 %v206, 16
    %v254 = vpop.permute.xlu0 %253
    %255 = vrot.lane.b32.xlu0 %v208, 16
    %v256 = vpop.permute.xlu0 %255
    %vm257 = vcmp.lt.s32.totalorder %v223, 16
    %v258 = vsel %vm257, %v254, %v256
    %v259 = vsel %vm257, %v256, %v254
    %v260 = vld [vmem:[#allocation2 + $0x90] sm:$0xff]
    %v261 = vld [vmem:[#allocation2 + $0x98] sm:$0xff]
    %v262 = vmul.f32 %v260, %v252
    %v263 = vmul.f32 %v261, %v251
    %v264 = vadd.f32 %v238, %v262
    %v265 = vadd.f32 %v239, %v263
    %v266 = vld [vmem:[#allocation2 + $0xe0] sm:$0xff]
    %v267 = vld [vmem:[#allocation2 + $0xe8] sm:$0xff]
    %v268 = vmul.f32 %v266, %v259
    %v269 = vmul.f32 %v267, %v258
    %v270 = vadd.f32 %v244, %v268
    %v271 = vadd.f32 %v245, %v269
    %272 = vrot.lane.b32.xlu0 %v206, 127
    %v273 = vpop.permute.xlu0 %272
    %274 = vrot.lane.b32.xlu0 %v208, 127
    %v275 = vpop.permute.xlu0 %274
    %vm276 = vcmp.lt.s32.totalorder %v223, 127
    %v277 = vsel %vm276, %v273, %v275
    %v278 = vsel %vm276, %v275, %v273
    %279 = vrot.lane.b32.xlu0 %v206, 112
    %v280 = vpop.permute.xlu0 %279
    %281 = vrot.lane.b32.xlu0 %v208, 112
    %v282 = vpop.permute.xlu0 %281
    %vm283 = vcmp.lt.s32.totalorder %v223, 112
    %v284 = vsel %vm283, %v280, %v282
    %v285 = vsel %vm283, %v282, %v280
    %v286 = vld [vmem:[#allocation2 + $0xb0] sm:$0xff]
    %v287 = vld [vmem:[#allocation2 + $0xb8] sm:$0xff]
    %v288 = vmul.f32 %v286, %v277
    %v289 = vmul.f32 %v287, %v278
    %v290 = vadd.f32 %v264, %v288
    %v291 = vadd.f32 %v265, %v289
    %v292 = vld [vmem:[#allocation2 + $0x100] sm:$0xff]
    %v293 = vld [vmem:[#allocation2 + $0x108] sm:$0xff]
    %v294 = vmul.f32 %v292, %v284
    %v295 = vmul.f32 %v293, %v285
    %v296 = vadd.f32 %v270, %v294
    %v297 = vadd.f32 %v271, %v295
    %298 = vrot.lane.b32.xlu0 %v206, 126
    %v299 = vpop.permute.xlu0 %298
    %300 = vrot.lane.b32.xlu0 %v208, 126
    %v301 = vpop.permute.xlu0 %300
    %vm302 = vcmp.lt.s32.totalorder %v223, 126
    %v303 = vsel %vm302, %v299, %v301
    %v304 = vsel %vm302, %v301, %v299
    %305 = vrot.lane.b32.xlu0 %v206, 96
    %v306 = vpop.permute.xlu0 %305
    %307 = vrot.lane.b32.xlu0 %v208, 96
    %v308 = vpop.permute.xlu0 %307
    %vm309 = vcmp.lt.s32.totalorder %v223, 96
    %v310 = vsel %vm309, %v306, %v308
    %v311 = vsel %vm309, %v308, %v306
    %v312 = vld [vmem:[#allocation2 + $0xc0] sm:$0xff]
    %v313 = vld [vmem:[#allocation2 + $0xc8] sm:$0xff]
    %v314 = vmul.f32 %v312, %v303
    %v315 = vmul.f32 %v313, %v304
    %v316 = vadd.f32 %v290, %v314
    %v317 = vadd.f32 %v291, %v315
    %v318 = vld [vmem:[#allocation2 + $0x110] sm:$0xff]
    %v319 = vld [vmem:[#allocation2 + $0x118] sm:$0xff]
    %v320 = vmul.f32 %v318, %v310
    %v321 = vmul.f32 %v319, %v311
    %v322 = vadd.f32 %v296, %v320
    %v323 = vadd.f32 %v297, %v321
    %324 = vset.pattern.permute.xlu0 6
    %325 = vperm.xlu0 %324, %v31
    %v326 = vpop.permute.xlu0 %325
    %v328 = vadd.f32 %v206, %v326
    %v329 = vadd.f32 %v208, %v326
    %v330 = vadd.f32 %v316, %v322
    %v331 = vadd.f32 %v317, %v323
    %v332 = vadd.f32 %v328, %v330
    %v333 = vadd.f32 %v329, %v331
    %v334 = vmax.f32 %v332, 0.0
    %v335 = vmax.f32 %v333, 0.0
    %v336 = vld [vmem:[%s3 + $0x60] sm:$0xff]
    %v337 = vld [vmem:[%s3 + $0x68] sm:$0xff]
    %v338 = vld [vmem:[%s3 + $0x70] sm:$0xff]
    %v339 = vld [vmem:[%s3 + $0x78] sm:$0xff]
    %340 = vset.pattern.permute.xlu0 0
    %341 = vperm.xlu0 %340, %v31
    %v342 = vpop.permute.xlu0 %341
    %345 = vset.pattern.permute.xlu0 0
    %346 = vperm.xlu0 %345, %v32
    %v347 = vpop.permute.xlu0 %346
    %350 = vset.pattern.permute.xlu0 0
    %351 = vperm.xlu0 %350, %v33
    %v352 = vpop.permute.xlu0 %351
    %355 = vset.pattern.permute.xlu0 0
    %356 = vperm.xlu0 %355, %v34
    %v357 = vpop.permute.xlu0 %356
    %vm359 = vcmask 64512
    %v361 = vsel %vm359, %v336, 0
    %v364 = vsel %vm359, %v337, 0
    %v367 = vsel %vm359, %v338, 0
    %v370 = vsel %vm359, %v339, 0
    %372 = vmatprep.subr.mxu0 %v335
    %373 = vmatpush1.msra.mxu0 %v334
    %374 = vmatprep.subr.mxu0 0.0
    %375 = vmatpush1.msra.mxu0 0.0
    %376 = vmatprep.subr.mxu0 0.0
    %377 = vmatpush1.msra.mxu0 0.0
    %378 = vmatprep.subr.mxu0 0.0
    %379 = vmatpush1.msra.mxu0 0.0
    %380 = vmatprep.subr.mxu0 0.0
    %381 = vmatpush1.msra.mxu0 0.0
    %382 = vmatprep.subr.mxu0 0.0
    %383 = vmatpush1.msra.mxu0 0.0
    %384 = vmatprep.subr.mxu0 0.0
    %385 = vmatpush1.msra.mxu0 0.0
    %386 = vmatprep.subr.mxu0 0.0
    %387 = vmatpush1.msra.mxu0 0.0
    %388 = vmatprep.subr.mxu0 0.0
    %389 = vmatpush1.msra.mxu0 0.0
    %390 = vmatprep.subr.mxu0 0.0
    %391 = vmatpush1.msra.mxu0 0.0
    %392 = vmatprep.subr.mxu0 0.0
    %393 = vmatpush1.msra.mxu0 0.0
    %394 = vmatprep.subr.mxu0 0.0
    %395 = vmatpush1.msra.mxu0 0.0
    %396 = vmatprep.subr.mxu0 0.0
    %397 = vmatpush1.msra.mxu0 0.0
    %398 = vmatprep.subr.mxu0 0.0
    %399 = vmatpush1.msra.mxu0 0.0
    %400 = vmatprep.subr.mxu0 0.0
    %401 = vmatpush1.msra.mxu0 0.0
    %402 = vmatprep.subr.mxu0 0.0
    %403 = vmatpush1.msra.mxu0 0.0
    %404 = vmatprep.subr.mxu0 0.0
    %405 = vmatpush1.msra.mxu0 0.0
    %406 = vmatprep.subr.mxu0 0.0
    %407 = vmatpush1.msra.mxu0 0.0
    %408 = vmatprep.subr.mxu0 0.0
    %409 = vmatpush1.msra.mxu0 0.0
    %410 = vmatprep.subr.mxu0 0.0
    %411 = vmatpush1.msra.mxu0 0.0
    %412 = vmatprep.subr.mxu0 0.0
    %413 = vmatpush1.msra.mxu0 0.0
    %414 = vmatprep.subr.mxu0 0.0
    %415 = vmatpush1.msra.mxu0 0.0
    %416 = vmatprep.subr.mxu0 0.0
    %417 = vmatpush1.msra.mxu0 0.0
    %418 = vmatprep.subr.mxu0 0.0
    %419 = vmatpush1.msra.mxu0 0.0
    %420 = vmatprep.subr.mxu0 0.0
    %421 = vmatpush1.msra.mxu0 0.0
    %422 = vmatprep.subr.mxu0 0.0
    %423 = vmatpush1.msra.mxu0 0.0
    %424 = vmatprep.subr.mxu0 0.0
    %425 = vmatpush1.msra.mxu0 0.0
    %426 = vmatprep.subr.mxu0 0.0
    %427 = vmatpush1.msra.mxu0 0.0
    %428 = vmatprep.subr.mxu0 0.0
    %429 = vmatpush1.msra.mxu0 0.0
    %430 = vmatprep.subr.mxu0 0.0
    %431 = vmatpush1.msra.mxu0 0.0
    %432 = vmatprep.subr.mxu0 0.0
    %433 = vmatpush1.msra.mxu0 0.0
    %434 = vmatprep.subr.mxu0 0.0
    %435 = vmatpush1.msra.mxu0 0.0
    %436 = vmatprep.mubr.f32.mxu0 0.0
    %437 = vmatmul.mubr.f32.gmra.mrb[0].mxu0 %v361
    %v438 = vpop.f32.mrb[0].mxu0
    %v439 = vadd.f32 %v342, %v438
    %v440 = vpop.f32.mrb[0].mxu0
    %v441 = vadd.f32 %v342, %v440
    %442 = vmatprep.mubr.f32.mxu0 0.0
    %443 = vmatmul.mubr.f32.gmra.mrb[0].mxu0 %v364
    %v444 = vpop.f32.mrb[0].mxu0
    %v445 = vadd.f32 %v347, %v444
    %v446 = vpop.f32.mrb[0].mxu0
    %v447 = vadd.f32 %v347, %v446
    %448 = vmatprep.mubr.f32.mxu0 0.0
    %449 = vmatmul.mubr.f32.gmra.mrb[0].mxu0 %v367
    %v450 = vpop.f32.mrb[0].mxu0
    %v451 = vadd.f32 %v352, %v450
    %v452 = vpop.f32.mrb[0].mxu0
    %v453 = vadd.f32 %v352, %v452
    %454 = vmatprep.mubr.f32.mxu0 0.0
    %455 = vmatmul.mubr.f32.gmra.mrb[0].mxu0 %v370
    %v456 = vpop.f32.mrb[0].mxu0
    %v457 = vadd.f32 %v357, %v456
    %v458 = vpop.f32.mrb[0].mxu0
    %v459 = vadd.f32 %v357, %v458
    %460 = vdwg.mxu0
    %461 = vmatprep.subr.mxu0 0.0
    %462 = vmatpush1.msra.mxu0 0.00390625
    %463 = vmatprep.subr.mxu0 0.0
    %464 = vmatpush1.msra.mxu0 0.00390625
    %465 = vmatprep.subr.mxu0 0.0
    %466 = vmatpush1.msra.mxu0 0.00390625
    %467 = vmatprep.subr.mxu0 0.0
    %468 = vmatpush1.msra.mxu0 0.00390625
    %469 = vmatprep.subr.mxu0 0.0
    %470 = vmatpush1.msra.mxu0 0.00390625
    %471 = vmatprep.subr.mxu0 0.0
    %472 = vmatpush1.msra.mxu0 0.00390625
    %473 = vmatprep.subr.mxu0 0.0
    %474 = vmatpush1.msra.mxu0 0.00390625
    %475 = vmatprep.subr.mxu0 0.0
    %476 = vmatpush1.msra.mxu0 0.00390625
    %477 = vmatprep.subr.mxu0 0.0
    %478 = vmatpush1.msra.mxu0 0.00390625
    %479 = vmatprep.subr.mxu0 0.0
    %480 = vmatpush1.msra.mxu0 0.00390625
    %481 = vmatprep.subr.mxu0 0.0
    %482 = vmatpush1.msra.mxu0 0.00390625
    %483 = vmatprep.subr.mxu0 0.0
    %484 = vmatpush1.msra.mxu0 0.00390625
    %485 = vmatprep.subr.mxu0 0.0
    %486 = vmatpush1.msra.mxu0 0.00390625
    %487 = vmatprep.subr.mxu0 0.0
    %488 = vmatpush1.msra.mxu0 0.00390625
    %489 = vmatprep.subr.mxu0 0.0
    %490 = vmatpush1.msra.mxu0 0.00390625
    %491 = vmatprep.subr.mxu0 0.0
    %492 = vmatpush1.msra.mxu0 0.00390625
    %493 = vmatprep.subr.mxu0 0.0
    %494 = vmatpush1.msra.mxu0 0.00390625
    %495 = vmatprep.subr.mxu0 0.0
    %496 = vmatpush1.msra.mxu0 0.00390625
    %497 = vmatprep.subr.mxu0 0.0
    %498 = vmatpush1.msra.mxu0 0.00390625
    %499 = vmatprep.subr.mxu0 0.0
    %500 = vmatpush1.msra.mxu0 0.00390625
    %501 = vmatprep.subr.mxu0 0.0
    %502 = vmatpush1.msra.mxu0 0.00390625
    %503 = vmatprep.subr.mxu0 0.0
    %504 = vmatpush1.msra.mxu0 0.00390625
    %505 = vmatprep.subr.mxu0 0.0
    %506 = vmatpush1.msra.mxu0 0.00390625
    %507 = vmatprep.subr.mxu0 0.0
    %508 = vmatpush1.msra.mxu0 0.00390625
    %509 = vmatprep.subr.mxu0 0.0
    %510 = vmatpush1.msra.mxu0 0.00390625
    %511 = vmatprep.subr.mxu0 0.0
    %512 = vmatpush1.msra.mxu0 0.00390625
    %513 = vmatprep.subr.mxu0 0.0
    %514 = vmatpush1.msra.mxu0 0.00390625
    %515 = vmatprep.subr.mxu0 0.0
    %516 = vmatpush1.msra.mxu0 0.00390625
    %517 = vmatprep.subr.mxu0 0.0
    %518 = vmatpush1.msra.mxu0 0.00390625
    %519 = vmatprep.subr.mxu0 0.0
    %520 = vmatpush1.msra.mxu0 0.00390625
    %521 = vmatprep.subr.mxu0 0.0
    %522 = vmatpush1.msra.mxu0 0.00390625
    %523 = vmatprep.subr.mxu0 0.0
    %524 = vmatpush1.msra.mxu0 0.00390625
    %525 = vmatprep.mubr.f32.mxu0 %v441
    %526 = vmatmul.mubr.f32.gmra.mrb[0].mxu0 %v439
    %v527 = vpop.f32.mrb[0].mxu0
    %v528 = vadd.f32 0.0, %v527
    %v529 = vpop.f32.mrb[0].mxu0
    %530 = vmatprep.mubr.f32.mxu0 %v447
    %531 = vmatmul.mubr.f32.gmra.mrb[0].mxu0 %v445
    %v532 = vpop.f32.mrb[0].mxu0
    %v533 = vadd.f32 0.0, %v532
    %v534 = vpop.f32.mrb[0].mxu0
    %535 = vmatprep.mubr.f32.mxu0 %v453
    %536 = vmatmul.mubr.f32.gmra.mrb[0].mxu0 %v451
    %v537 = vpop.f32.mrb[0].mxu0
    %v538 = vadd.f32 0.0, %v537
    %v539 = vpop.f32.mrb[0].mxu0
    %540 = vmatprep.mubr.f32.mxu0 %v459
    %541 = vmatmul.mubr.f32.gmra.mrb[0].mxu0 %v457
    %v542 = vpop.f32.mrb[0].mxu0
    %v543 = vadd.f32 0.0, %v542
    %v544 = vpop.f32.mrb[0].mxu0
    %545 = vdwg.mxu0
    %547 = vset.pattern.permute.xlu0 0
    %548 = vperm.xlu0 %547, %v528
    %v549 = vpop.permute.xlu0 %548
    %552 = vset.pattern.permute.xlu0 0
    %553 = vperm.xlu0 %552, %v533
    %v554 = vpop.permute.xlu0 %553
    %557 = vset.pattern.permute.xlu0 0
    %558 = vperm.xlu0 %557, %v538
    %v559 = vpop.permute.xlu0 %558
    %562 = vset.pattern.permute.xlu0 0
    %563 = vperm.xlu0 %562, %v543
    %v564 = vpop.permute.xlu0 %563
    %v566 = vsub.f32 %v439, %v549
    %v567 = vsub.f32 %v441, %v549
    %v568 = vsub.f32 %v445, %v554
    %v569 = vsub.f32 %v447, %v554
    %v570 = vsub.f32 %v451, %v559
    %v571 = vsub.f32 %v453, %v559
    %v572 = vsub.f32 %v457, %v564
    %v573 = vsub.f32 %v459, %v564
    %v574 = vmul.f32 %v566, %v566
    %v575 = vmul.f32 %v567, %v567
    %v576 = vmul.f32 %v568, %v568
    %v577 = vmul.f32 %v569, %v569
    %v578 = vmul.f32 %v570, %v570
    %v579 = vmul.f32 %v571, %v571
    %v580 = vmul.f32 %v572, %v572
    %v581 = vmul.f32 %v573, %v573
    %582 = vmatprep.subr.mxu0 0.0
    %583 = vmatpush1.msra.mxu0 0.00390625
    %584 = vmatprep.subr.mxu0 0.0
    %585 = vmatpush1.msra.mxu0 0.00390625
    %586 = vmatprep.subr.mxu0 0.0
    %587 = vmatpush1.msra.mxu0 0.00390625
    %588 = vmatprep.subr.mxu0 0.0
    %589 = vmatpush1.msra.mxu0 0.00390625
    %590 = vmatprep.subr.mxu0 0.0
    %591 = vmatpush1.msra.mxu0 0.00390625
    %592 = vmatprep.subr.mxu0 0.0
    %593 = vmatpush1.msra.mxu0 0.00390625
    %594 = vmatprep.subr.mxu0 0.0
    %595 = vmatpush1.msra.mxu0 0.00390625
    %596 = vmatprep.subr.mxu0 0.0
    %597 = vmatpush1.msra.mxu0 0.00390625
    %598 = vmatprep.subr.mxu0 0.0
    %599 = vmatpush1.msra.mxu0 0.00390625
    %600 = vmatprep.subr.mxu0 0.0
    %601 = vmatpush1.msra.mxu0 0.00390625
    %602 = vmatprep.subr.mxu0 0.0
    %603 = vmatpush1.msra.mxu0 0.00390625
    %604 = vmatprep.subr.mxu0 0.0
    %605 = vmatpush1.msra.mxu0 0.00390625
    %606 = vmatprep.subr.mxu0 0.0
    %607 = vmatpush1.msra.mxu0 0.00390625
    %608 = vmatprep.subr.mxu0 0.0
    %609 = vmatpush1.msra.mxu0 0.00390625
    %610 = vmatprep.subr.mxu0 0.0
    %611 = vmatpush1.msra.mxu0 0.00390625
    %612 = vmatprep.subr.mxu0 0.0
    %613 = vmatpush1.msra.mxu0 0.00390625
    %614 = vmatprep.subr.mxu0 0.0
    %615 = vmatpush1.msra.mxu0 0.00390625
    %616 = vmatprep.subr.mxu0 0.0
    %617 = vmatpush1.msra.mxu0 0.00390625
    %618 = vmatprep.subr.mxu0 0.0
    %619 = vmatpush1.msra.mxu0 0.00390625
    %620 = vmatprep.subr.mxu0 0.0
    %621 = vmatpush1.msra.mxu0 0.00390625
    %622 = vmatprep.subr.mxu0 0.0
    %623 = vmatpush1.msra.mxu0 0.00390625
    %624 = vmatprep.subr.mxu0 0.0
    %625 = vmatpush1.msra.mxu0 0.00390625
    %626 = vmatprep.subr.mxu0 0.0
    %627 = vmatpush1.msra.mxu0 0.00390625
    %628 = vmatprep.subr.mxu0 0.0
    %629 = vmatpush1.msra.mxu0 0.00390625
    %630 = vmatprep.subr.mxu0 0.0
    %631 = vmatpush1.msra.mxu0 0.00390625
    %632 = vmatprep.subr.mxu0 0.0
    %633 = vmatpush1.msra.mxu0 0.00390625
    %634 = vmatprep.subr.mxu0 0.0
    %635 = vmatpush1.msra.mxu0 0.00390625
    %636 = vmatprep.subr.mxu0 0.0
    %637 = vmatpush1.msra.mxu0 0.00390625
    %638 = vmatprep.subr.mxu0 0.0
    %639 = vmatpush1.msra.mxu0 0.00390625
    %640 = vmatprep.subr.mxu0 0.0
    %641 = vmatpush1.msra.mxu0 0.00390625
    %642 = vmatprep.subr.mxu0 0.0
    %643 = vmatpush1.msra.mxu0 0.00390625
    %644 = vmatprep.subr.mxu0 0.0
    %645 = vmatpush1.msra.mxu0 0.00390625
    %646 = vmatprep.mubr.f32.mxu0 %v575
    %647 = vmatmul.mubr.f32.gmra.mrb[0].mxu0 %v574
    %v648 = vpop.f32.mrb[0].mxu0
    %v649 = vadd.f32 0.0, %v648
    %v650 = vpop.f32.mrb[0].mxu0
    %651 = vmatprep.mubr.f32.mxu0 %v577
    %652 = vmatmul.mubr.f32.gmra.mrb[0].mxu0 %v576
    %v653 = vpop.f32.mrb[0].mxu0
    %v654 = vadd.f32 0.0, %v653
    %v655 = vpop.f32.mrb[0].mxu0
    %656 = vmatprep.mubr.f32.mxu0 %v579
    %657 = vmatmul.mubr.f32.gmra.mrb[0].mxu0 %v578
    %v658 = vpop.f32.mrb[0].mxu0
    %v659 = vadd.f32 0.0, %v658
    %v660 = vpop.f32.mrb[0].mxu0
    %661 = vmatprep.mubr.f32.mxu0 %v581
    %662 = vmatmul.mubr.f32.gmra.mrb[0].mxu0 %v580
    %v663 = vpop.f32.mrb[0].mxu0
    %v664 = vadd.f32 0.0, %v663
    %v665 = vpop.f32.mrb[0].mxu0
    %666 = vdwg.mxu0
    %v667 = vld [vmem:[%s3] sm:$0xff]
    %v668 = vld [vmem:[%s3 + $0x8] sm:$0xff]
    %v669 = vld [vmem:[%s3 + $0x10] sm:$0xff]
    %v670 = vld [vmem:[%s3 + $0x18] sm:$0xff]
    %vm671 = vcmask 261120
    %v673 = vsel %vm671, %v667, 0
    %v676 = vsel %vm671, %v668, 0
    %v679 = vsel %vm671, %v669, 0
    %v682 = vsel %vm671, %v670, 0
    %684 = vmatprep.subr.mxu0 0.0
    %685 = vmatpush1.msra.mxu0 %v528
    %686 = vmatprep.subr.mxu0 0.0
    %687 = vmatpush1.msra.mxu0 %v533
    %688 = vmatprep.subr.mxu0 0.0
    %689 = vmatpush1.msra.mxu0 %v538
    %690 = vmatprep.subr.mxu0 0.0
    %691 = vmatpush1.msra.mxu0 %v543
    %692 = vmatprep.subr.mxu0 0.0
    %693 = vmatpush1.msra.mxu0 0.0
    %694 = vmatprep.subr.mxu0 0.0
    %695 = vmatpush1.msra.mxu0 0.0
    %696 = vmatprep.subr.mxu0 0.0
    %697 = vmatpush1.msra.mxu0 0.0
    %698 = vmatprep.subr.mxu0 0.0
    %699 = vmatpush1.msra.mxu0 0.0
    %700 = vmatprep.subr.mxu0 0.0
    %701 = vmatpush1.msra.mxu0 0.0
    %702 = vmatprep.subr.mxu0 0.0
    %703 = vmatpush1.msra.mxu0 0.0
    %704 = vmatprep.subr.mxu0 0.0
    %705 = vmatpush1.msra.mxu0 0.0
    %706 = vmatprep.subr.mxu0 0.0
    %707 = vmatpush1.msra.mxu0 0.0
    %708 = vmatprep.subr.mxu0 0.0
    %709 = vmatpush1.msra.mxu0 0.0
    %710 = vmatprep.subr.mxu0 0.0
    %711 = vmatpush1.msra.mxu0 0.0
    %712 = vmatprep.subr.mxu0 0.0
    %713 = vmatpush1.msra.mxu0 0.0
    %714 = vmatprep.subr.mxu0 0.0
    %715 = vmatpush1.msra.mxu0 0.0
    %716 = vmatprep.subr.mxu0 0.0
    %717 = vmatpush1.msra.mxu0 0.0
    %718 = vmatprep.subr.mxu0 0.0
    %719 = vmatpush1.msra.mxu0 0.0
    %720 = vmatprep.subr.mxu0 0.0
    %721 = vmatpush1.msra.mxu0 0.0
    %722 = vmatprep.subr.mxu0 0.0
    %723 = vmatpush1.msra.mxu0 0.0
    %724 = vmatprep.subr.mxu0 0.0
    %725 = vmatpush1.msra.mxu0 0.0
    %726 = vmatprep.subr.mxu0 0.0
    %727 = vmatpush1.msra.mxu0 0.0
    %728 = vmatprep.subr.mxu0 0.0
    %729 = vmatpush1.msra.mxu0 0.0
    %730 = vmatprep.subr.mxu0 0.0
    %731 = vmatpush1.msra.mxu0 0.0
    %732 = vmatprep.subr.mxu0 0.0
    %733 = vmatpush1.msra.mxu0 0.0
    %734 = vmatprep.subr.mxu0 0.0
    %735 = vmatpush1.msra.mxu0 0.0
    %736 = vmatprep.subr.mxu0 0.0
    %737 = vmatpush1.msra.mxu0 0.0
    %738 = vmatprep.subr.mxu0 0.0
    %739 = vmatpush1.msra.mxu0 0.0
    %740 = vmatprep.subr.mxu0 0.0
    %741 = vmatpush1.msra.mxu0 0.0
    %742 = vmatprep.subr.mxu0 0.0
    %743 = vmatpush1.msra.mxu0 0.0
    %744 = vmatprep.subr.mxu0 0.0
    %745 = vmatpush1.msra.mxu0 0.0
    %746 = vmatprep.subr.mxu0 0.0
    %747 = vmatpush1.msra.mxu0 0.0
    %748 = vmatprep.mubr.f32.mxu0 0.0
    %749 = vmatmul.mubr.f32.gmra.mrb[0].mxu0 %v673
    %v750 = vpop.f32.mrb[0].mxu0
    %v751 = vadd.f32 0.0, %v750
    %v752 = vpop.f32.mrb[0].mxu0
    %753 = vmatprep.mubr.f32.mxu0 0.0
    %754 = vmatmul.mubr.f32.gmra.mrb[0].mxu0 %v676
    %v755 = vpop.f32.mrb[0].mxu0
    %v756 = vadd.f32 0.0, %v755
    %v757 = vpop.f32.mrb[0].mxu0
    %758 = vmatprep.mubr.f32.mxu0 0.0
    %759 = vmatmul.mubr.f32.gmra.mrb[0].mxu0 %v679
    %v760 = vpop.f32.mrb[0].mxu0
    %v761 = vadd.f32 0.0, %v760
    %v762 = vpop.f32.mrb[0].mxu0
    %763 = vmatprep.mubr.f32.mxu0 0.0
    %764 = vmatmul.mubr.f32.gmra.mrb[0].mxu0 %v682
    %v765 = vpop.f32.mrb[0].mxu0
    %v766 = vadd.f32 0.0, %v765
    %v767 = vpop.f32.mrb[0].mxu0
    %768 = vdwg.mxu0
    %v769 = vsub.f32 %v528, %v751
    %v770 = vsub.f32 %v533, %v756
    %v771 = vsub.f32 %v538, %v761
    %v772 = vsub.f32 %v543, %v766
    %v773 = vmul.f32 %v769, %v769
    %v774 = vmul.f32 %v770, %v770
    %v775 = vmul.f32 %v771, %v771
    %v776 = vmul.f32 %v772, %v772
    %v777 = vadd.f32 %v649, %v773
    %v778 = vadd.f32 %v654, %v774
    %v779 = vadd.f32 %v659, %v775
    %v780 = vadd.f32 %v664, %v776
    %v781 = vadd.f32 %v649, 1e-05
    %v782 = vadd.f32 %v654, 1e-05
    %v783 = vadd.f32 %v659, 1e-05
    %v784 = vadd.f32 %v664, 1e-05
    %v785 = vrsqrt.pop %v781
    %v786 = vrsqrt.pop %v782
    %v787 = vrsqrt.pop %v783
    %v788 = vrsqrt.pop %v784
    %v789 = vmul.f32 %v785, 0.7
    %v790 = vmul.f32 %v786, 0.7
    %v791 = vmul.f32 %v787, 0.7
    %v792 = vmul.f32 %v788, 0.7
    %794 = vset.pattern.permute.xlu0 0
    %795 = vperm.xlu0 %794, %v789
    %v796 = vpop.permute.xlu0 %795
    %799 = vset.pattern.permute.xlu0 0
    %800 = vperm.xlu0 %799, %v790
    %v801 = vpop.permute.xlu0 %800
    %804 = vset.pattern.permute.xlu0 0
    %805 = vperm.xlu0 %804, %v791
    %v806 = vpop.permute.xlu0 %805
    %809 = vset.pattern.permute.xlu0 0
    %810 = vperm.xlu0 %809, %v792
    %v811 = vpop.permute.xlu0 %810
    %v813 = vmul.f32 %v566, %v796
    %v814 = vmul.f32 %v567, %v796
    %v815 = vmul.f32 %v568, %v801
    %v816 = vmul.f32 %v569, %v801
    %v817 = vmul.f32 %v570, %v806
    %v818 = vmul.f32 %v571, %v806
    %v819 = vmul.f32 %v572, %v811
    %v820 = vmul.f32 %v573, %v811
    %822 = vset.pattern.permute.xlu0 0
    %823 = vperm.xlu0 %822, %v751
    %v824 = vpop.permute.xlu0 %823
    %827 = vset.pattern.permute.xlu0 0
    %828 = vperm.xlu0 %827, %v756
    %v829 = vpop.permute.xlu0 %828
    %832 = vset.pattern.permute.xlu0 0
    %833 = vperm.xlu0 %832, %v761
    %v834 = vpop.permute.xlu0 %833
    %837 = vset.pattern.permute.xlu0 0
    %838 = vperm.xlu0 %837, %v766
    %v839 = vpop.permute.xlu0 %838
    %v841 = vsub.f32 %v439, %v824
    %v842 = vsub.f32 %v441, %v824
    %v843 = vsub.f32 %v445, %v829
    %v844 = vsub.f32 %v447, %v829
    %v845 = vsub.f32 %v451, %v834
    %v846 = vsub.f32 %v453, %v834
    %v847 = vsub.f32 %v457, %v839
    %v848 = vsub.f32 %v459, %v839
    %849 = vmatprep.subr.mxu0 0.0
    %850 = vmatpush1.msra.mxu0 %v777
    %851 = vmatprep.subr.mxu0 0.0
    %852 = vmatpush1.msra.mxu0 %v778
    %853 = vmatprep.subr.mxu0 0.0
    %854 = vmatpush1.msra.mxu0 %v779
    %855 = vmatprep.subr.mxu0 0.0
    %856 = vmatpush1.msra.mxu0 %v780
    %857 = vmatprep.subr.mxu0 0.0
    %858 = vmatpush1.msra.mxu0 0.0
    %859 = vmatprep.subr.mxu0 0.0
    %860 = vmatpush1.msra.mxu0 0.0
    %861 = vmatprep.subr.mxu0 0.0
    %862 = vmatpush1.msra.mxu0 0.0
    %863 = vmatprep.subr.mxu0 0.0
    %864 = vmatpush1.msra.mxu0 0.0
    %865 = vmatprep.subr.mxu0 0.0
    %866 = vmatpush1.msra.mxu0 0.0
    %867 = vmatprep.subr.mxu0 0.0
    %868 = vmatpush1.msra.mxu0 0.0
    %869 = vmatprep.subr.mxu0 0.0
    %870 = vmatpush1.msra.mxu0 0.0
    %871 = vmatprep.subr.mxu0 0.0
    %872 = vmatpush1.msra.mxu0 0.0
    %873 = vmatprep.subr.mxu0 0.0
    %874 = vmatpush1.msra.mxu0 0.0
    %875 = vmatprep.subr.mxu0 0.0
    %876 = vmatpush1.msra.mxu0 0.0
    %877 = vmatprep.subr.mxu0 0.0
    %878 = vmatpush1.msra.mxu0 0.0
    %879 = vmatprep.subr.mxu0 0.0
    %880 = vmatpush1.msra.mxu0 0.0
    %881 = vmatprep.subr.mxu0 0.0
    %882 = vmatpush1.msra.mxu0 0.0
    %883 = vmatprep.subr.mxu0 0.0
    %884 = vmatpush1.msra.mxu0 0.0
    %885 = vmatprep.subr.mxu0 0.0
    %886 = vmatpush1.msra.mxu0 0.0
    %887 = vmatprep.subr.mxu0 0.0
    %888 = vmatpush1.msra.mxu0 0.0
    %889 = vmatprep.subr.mxu0 0.0
    %890 = vmatpush1.msra.mxu0 0.0
    %891 = vmatprep.subr.mxu0 0.0
    %892 = vmatpush1.msra.mxu0 0.0
    %893 = vmatprep.subr.mxu0 0.0
    %894 = vmatpush1.msra.mxu0 0.0
    %895 = vmatprep.subr.mxu0 0.0
    %896 = vmatpush1.msra.mxu0 0.0
    %897 = vmatprep.subr.mxu0 0.0
    %898 = vmatpush1.msra.mxu0 0.0
    %899 = vmatprep.subr.mxu0 0.0
    %900 = vmatpush1.msra.mxu0 0.0
    %901 = vmatprep.subr.mxu0 0.0
    %902 = vmatpush1.msra.mxu0 0.0
    %903 = vmatprep.subr.mxu0 0.0
    %904 = vmatpush1.msra.mxu0 0.0
    %905 = vmatprep.subr.mxu0 0.0
    %906 = vmatpush1.msra.mxu0 0.0
    %907 = vmatprep.subr.mxu0 0.0
    %908 = vmatpush1.msra.mxu0 0.0
    %909 = vmatprep.subr.mxu0 0.0
    %910 = vmatpush1.msra.mxu0 0.0
    %911 = vmatprep.subr.mxu0 0.0
    %912 = vmatpush1.msra.mxu0 0.0
    %913 = vmatprep.mubr.f32.mxu0 0.0
    %914 = vmatmul.mubr.f32.gmra.mrb[0].mxu0 %v673
    %v915 = vpop.f32.mrb[0].mxu0
    %v916 = vadd.f32 1e-05, %v915
    %v917 = vpop.f32.mrb[0].mxu0
    %918 = vmatprep.mubr.f32.mxu0 0.0
    %919 = vmatmul.mubr.f32.gmra.mrb[0].mxu0 %v676
    %v920 = vpop.f32.mrb[0].mxu0
    %v921 = vadd.f32 1e-05, %v920
    %v922 = vpop.f32.mrb[0].mxu0
    %923 = vmatprep.mubr.f32.mxu0 0.0
    %924 = vmatmul.mubr.f32.gmra.mrb[0].mxu0 %v679
    %v925 = vpop.f32.mrb[0].mxu0
    %v926 = vadd.f32 1e-05, %v925
    %v927 = vpop.f32.mrb[0].mxu0
    %928 = vmatprep.mubr.f32.mxu0 0.0
    %929 = vmatmul.mubr.f32.gmra.mrb[0].mxu0 %v682
    %v930 = vpop.f32.mrb[0].mxu0
    %v931 = vadd.f32 1e-05, %v930
    %v932 = vpop.f32.mrb[0].mxu0
    %933 = vdwg.mxu0
    %v934 = vrsqrt.pop %v916
    %v935 = vrsqrt.pop %v921
    %v936 = vrsqrt.pop %v926
    %v937 = vrsqrt.pop %v931
    %942 = vrot.lane.b32.xlu0 %v934, 1
    %v943 = vpop.permute.xlu0 %942
    %944 = vrot.lane.b32.xlu0 %v935, 1
    %v945 = vpop.permute.xlu0 %944
    %946 = vrot.lane.b32.xlu0 %v936, 1
    %v947 = vpop.permute.xlu0 %946
    %948 = vrot.lane.b32.xlu0 %v937, 1
    %v949 = vpop.permute.xlu0 %948
    %v954 = vmul.f32 %v31, %v943
    %v955 = vmul.f32 %v32, %v945
    %v956 = vmul.f32 %v33, %v947
    %v957 = vmul.f32 %v34, %v949
    %959 = vset.pattern.permute.xlu0 1
    %960 = vperm.xlu0 %959, %v954
    %v961 = vpop.permute.xlu0 %960
    %964 = vset.pattern.permute.xlu0 1
    %965 = vperm.xlu0 %964, %v955
    %v966 = vpop.permute.xlu0 %965
    %969 = vset.pattern.permute.xlu0 1
    %970 = vperm.xlu0 %969, %v956
    %v971 = vpop.permute.xlu0 %970
    %974 = vset.pattern.permute.xlu0 1
    %975 = vperm.xlu0 %974, %v957
    %v976 = vpop.permute.xlu0 %975
    %v978 = vmul.f32 %v841, %v961
    %v979 = vmul.f32 %v842, %v961
    %v980 = vmul.f32 %v843, %v966
    %v981 = vmul.f32 %v844, %v966
    %v982 = vmul.f32 %v845, %v971
    %v983 = vmul.f32 %v846, %v971
    %v984 = vmul.f32 %v847, %v976
    %v985 = vmul.f32 %v848, %v976
    %v986 = vadd.f32 %v813, %v978
    %v987 = vadd.f32 %v814, %v979
    %v988 = vadd.f32 %v815, %v980
    %v989 = vadd.f32 %v816, %v981
    %v990 = vadd.f32 %v817, %v982
    %v991 = vadd.f32 %v818, %v983
    %v992 = vadd.f32 %v819, %v984
    %v993 = vadd.f32 %v820, %v985
    %994 = vset.pattern.permute.xlu0 2
    %995 = vperm.xlu0 %994, %v31
    %v996 = vpop.permute.xlu0 %995
    %998 = vset.pattern.permute.xlu0 2
    %999 = vperm.xlu0 %998, %v32
    %v1000 = vpop.permute.xlu0 %999
    %1002 = vset.pattern.permute.xlu0 2
    %1003 = vperm.xlu0 %1002, %v33
    %v1004 = vpop.permute.xlu0 %1003
    %1006 = vset.pattern.permute.xlu0 2
    %1007 = vperm.xlu0 %1006, %v34
    %v1008 = vpop.permute.xlu0 %1007
    %v1010 = vadd.f32 %v986, %v996
    %v1011 = vadd.f32 %v987, %v996
    %v1012 = vadd.f32 %v988, %v1000
    %v1013 = vadd.f32 %v989, %v1000
    %v1014 = vadd.f32 %v990, %v1004
    %v1015 = vadd.f32 %v991, %v1004
    %v1016 = vadd.f32 %v992, %v1008
    %v1017 = vadd.f32 %v993, %v1008
    %1018 = vmatprep.subr.mxu0 0.0
    %1019 = vmatpush1.msra.mxu0 0.00390625
    %1020 = vmatprep.subr.mxu0 0.0
    %1021 = vmatpush1.msra.mxu0 0.00390625
    %1022 = vmatprep.subr.mxu0 0.0
    %1023 = vmatpush1.msra.mxu0 0.00390625
    %1024 = vmatprep.subr.mxu0 0.0
    %1025 = vmatpush1.msra.mxu0 0.00390625
    %1026 = vmatprep.subr.mxu0 0.0
    %1027 = vmatpush1.msra.mxu0 0.00390625
    %1028 = vmatprep.subr.mxu0 0.0
    %1029 = vmatpush1.msra.mxu0 0.00390625
    %1030 = vmatprep.subr.mxu0 0.0
    %1031 = vmatpush1.msra.mxu0 0.00390625
    %1032 = vmatprep.subr.mxu0 0.0
    %1033 = vmatpush1.msra.mxu0 0.00390625
    %1034 = vmatprep.subr.mxu0 0.0
    %1035 = vmatpush1.msra.mxu0 0.00390625
    %1036 = vmatprep.subr.mxu0 0.0
    %1037 = vmatpush1.msra.mxu0 0.00390625
    %1038 = vmatprep.subr.mxu0 0.0
    %1039 = vmatpush1.msra.mxu0 0.00390625
    %1040 = vmatprep.subr.mxu0 0.0
    %1041 = vmatpush1.msra.mxu0 0.00390625
    %1042 = vmatprep.subr.mxu0 0.0
    %1043 = vmatpush1.msra.mxu0 0.00390625
    %1044 = vmatprep.subr.mxu0 0.0
    %1045 = vmatpush1.msra.mxu0 0.00390625
    %1046 = vmatprep.subr.mxu0 0.0
    %1047 = vmatpush1.msra.mxu0 0.00390625
    %1048 = vmatprep.subr.mxu0 0.0
    %1049 = vmatpush1.msra.mxu0 0.00390625
    %1050 = vmatprep.subr.mxu0 0.0
    %1051 = vmatpush1.msra.mxu0 0.00390625
    %1052 = vmatprep.subr.mxu0 0.0
    %1053 = vmatpush1.msra.mxu0 0.00390625
    %1054 = vmatprep.subr.mxu0 0.0
    %1055 = vmatpush1.msra.mxu0 0.00390625
    %1056 = vmatprep.subr.mxu0 0.0
    %1057 = vmatpush1.msra.mxu0 0.00390625
    %1058 = vmatprep.subr.mxu0 0.0
    %1059 = vmatpush1.msra.mxu0 0.00390625
    %1060 = vmatprep.subr.mxu0 0.0
    %1061 = vmatpush1.msra.mxu0 0.00390625
    %1062 = vmatprep.subr.mxu0 0.0
    %1063 = vmatpush1.msra.mxu0 0.00390625
    %1064 = vmatprep.subr.mxu0 0.0
    %1065 = vmatpush1.msra.mxu0 0.00390625
    %1066 = vmatprep.subr.mxu0 0.0
    %1067 = vmatpush1.msra.mxu0 0.00390625
    %1068 = vmatprep.subr.mxu0 0.0
    %1069 = vmatpush1.msra.mxu0 0.00390625
    %1070 = vmatprep.subr.mxu0 0.0
    %1071 = vmatpush1.msra.mxu0 0.00390625
    %1072 = vmatprep.subr.mxu0 0.0
    %1073 = vmatpush1.msra.mxu0 0.00390625
    %1074 = vmatprep.subr.mxu0 0.0
    %1075 = vmatpush1.msra.mxu0 0.00390625
    %1076 = vmatprep.subr.mxu0 0.0
    %1077 = vmatpush1.msra.mxu0 0.00390625
    %1078 = vmatprep.subr.mxu0 0.0
    %1079 = vmatpush1.msra.mxu0 0.00390625
    %1080 = vmatprep.subr.mxu0 0.0
    %1081 = vmatpush1.msra.mxu0 0.00390625
    %1082 = vmatprep.mubr.f32.mxu0 %v1011
    %1083 = vmatmul.mubr.f32.gmra.mrb[0].mxu0 %v1010
    %v1084 = vpop.f32.mrb[0].mxu0
    %v1085 = vadd.f32 0.0, %v1084
    %v1086 = vpop.f32.mrb[0].mxu0
    %1087 = vmatprep.mubr.f32.mxu0 %v1013
    %1088 = vmatmul.mubr.f32.gmra.mrb[0].mxu0 %v1012
    %v1089 = vpop.f32.mrb[0].mxu0
    %v1090 = vadd.f32 0.0, %v1089
    %v1091 = vpop.f32.mrb[0].mxu0
    %1092 = vmatprep.mubr.f32.mxu0 %v1015
    %1093 = vmatmul.mubr.f32.gmra.mrb[0].mxu0 %v1014
    %v1094 = vpop.f32.mrb[0].mxu0
    %v1095 = vadd.f32 0.0, %v1094
    %v1096 = vpop.f32.mrb[0].mxu0
    %1097 = vmatprep.mubr.f32.mxu0 %v1017
    %1098 = vmatmul.mubr.f32.gmra.mrb[0].mxu0 %v1016
    %v1099 = vpop.f32.mrb[0].mxu0
    %v1100 = vadd.f32 0.0, %v1099
    %v1101 = vpop.f32.mrb[0].mxu0
    %1102 = vdwg.mxu0
    %v1103 = vld [vmem:[%s3 + $0x20] sm:$0xff]
    %v1104 = vld [vmem:[%s3 + $0x28] sm:$0xff]
    %v1105 = vld [vmem:[%s3 + $0x30] sm:$0xff]
    %v1106 = vld [vmem:[%s3 + $0x38] sm:$0xff]
    %v1108 = vsel %vm671, %v1103, 0
    %v1111 = vsel %vm671, %v1104, 0
    %v1114 = vsel %vm671, %v1105, 0
    %v1117 = vsel %vm671, %v1106, 0
    %1119 = vmatprep.subr.mxu0 0.0
    %1120 = vmatpush1.msra.mxu0 %v1085
    %1121 = vmatprep.subr.mxu0 0.0
    %1122 = vmatpush1.msra.mxu0 %v1090
    %1123 = vmatprep.subr.mxu0 0.0
    %1124 = vmatpush1.msra.mxu0 %v1095
    %1125 = vmatprep.subr.mxu0 0.0
    %1126 = vmatpush1.msra.mxu0 %v1100
    %1127 = vmatprep.subr.mxu0 0.0
    %1128 = vmatpush1.msra.mxu0 0.0
    %1129 = vmatprep.subr.mxu0 0.0
    %1130 = vmatpush1.msra.mxu0 0.0
    %1131 = vmatprep.subr.mxu0 0.0
    %1132 = vmatpush1.msra.mxu0 0.0
    %1133 = vmatprep.subr.mxu0 0.0
    %1134 = vmatpush1.msra.mxu0 0.0
    %1135 = vmatprep.subr.mxu0 0.0
    %1136 = vmatpush1.msra.mxu0 0.0
    %1137 = vmatprep.subr.mxu0 0.0
    %1138 = vmatpush1.msra.mxu0 0.0
    %1139 = vmatprep.subr.mxu0 0.0
    %1140 = vmatpush1.msra.mxu0 0.0
    %1141 = vmatprep.subr.mxu0 0.0
    %1142 = vmatpush1.msra.mxu0 0.0
    %1143 = vmatprep.subr.mxu0 0.0
    %1144 = vmatpush1.msra.mxu0 0.0
    %1145 = vmatprep.subr.mxu0 0.0
    %1146 = vmatpush1.msra.mxu0 0.0
    %1147 = vmatprep.subr.mxu0 0.0
    %1148 = vmatpush1.msra.mxu0 0.0
    %1149 = vmatprep.subr.mxu0 0.0
    %1150 = vmatpush1.msra.mxu0 0.0
    %1151 = vmatprep.subr.mxu0 0.0
    %1152 = vmatpush1.msra.mxu0 0.0
    %1153 = vmatprep.subr.mxu0 0.0
    %1154 = vmatpush1.msra.mxu0 0.0
    %1155 = vmatprep.subr.mxu0 0.0
    %1156 = vmatpush1.msra.mxu0 0.0
    %1157 = vmatprep.subr.mxu0 0.0
    %1158 = vmatpush1.msra.mxu0 0.0
    %1159 = vmatprep.subr.mxu0 0.0
    %1160 = vmatpush1.msra.mxu0 0.0
    %1161 = vmatprep.subr.mxu0 0.0
    %1162 = vmatpush1.msra.mxu0 0.0
    %1163 = vmatprep.subr.mxu0 0.0
    %1164 = vmatpush1.msra.mxu0 0.0
    %1165 = vmatprep.subr.mxu0 0.0
    %1166 = vmatpush1.msra.mxu0 0.0
    %1167 = vmatprep.subr.mxu0 0.0
    %1168 = vmatpush1.msra.mxu0 0.0
    %1169 = vmatprep.subr.mxu0 0.0
    %1170 = vmatpush1.msra.mxu0 0.0
    %1171 = vmatprep.subr.mxu0 0.0
    %1172 = vmatpush1.msra.mxu0 0.0
    %1173 = vmatprep.subr.mxu0 0.0
    %1174 = vmatpush1.msra.mxu0 0.0
    %1175 = vmatprep.subr.mxu0 0.0
    %1176 = vmatpush1.msra.mxu0 0.0
    %1177 = vmatprep.subr.mxu0 0.0
    %1178 = vmatpush1.msra.mxu0 0.0
    %1179 = vmatprep.subr.mxu0 0.0
    %1180 = vmatpush1.msra.mxu0 0.0
    %1181 = vmatprep.subr.mxu0 0.0
    %1182 = vmatpush1.msra.mxu0 0.0
    %1183 = vmatprep.mubr.f32.mxu0 0.0
    %1184 = vmatmul.mubr.f32.gmra.mrb[0].mxu0 %v1108
    %v1185 = vpop.f32.mrb[0].mxu0
    %v1186 = vadd.f32 0.0, %v1185
    %v1187 = vpop.f32.mrb[0].mxu0
    %1188 = vmatprep.mubr.f32.mxu0 0.0
    %1189 = vmatmul.mubr.f32.gmra.mrb[0].mxu0 %v1111
    %v1190 = vpop.f32.mrb[0].mxu0
    %v1191 = vadd.f32 0.0, %v1190
    %v1192 = vpop.f32.mrb[0].mxu0
    %1193 = vmatprep.mubr.f32.mxu0 0.0
    %1194 = vmatmul.mubr.f32.gmra.mrb[0].mxu0 %v1114
    %v1195 = vpop.f32.mrb[0].mxu0
    %v1196 = vadd.f32 0.0, %v1195
    %v1197 = vpop.f32.mrb[0].mxu0
    %1198 = vmatprep.mubr.f32.mxu0 0.0
    %1199 = vmatmul.mubr.f32.gmra.mrb[0].mxu0 %v1117
    %v1200 = vpop.f32.mrb[0].mxu0
    %v1201 = vadd.f32 0.0, %v1200
    %v1202 = vpop.f32.mrb[0].mxu0
    %1203 = vdwg.mxu0
    %v1204 = vmax.f32 %v1186, 0.0
    %v1205 = vmax.f32 %v1191, 0.0
    %v1206 = vmax.f32 %v1196, 0.0
    %v1207 = vmax.f32 %v1201, 0.0
    %1212 = vrot.lane.b32.xlu0 %v1204, 3
    %v1213 = vpop.permute.xlu0 %1212
    %1214 = vrot.lane.b32.xlu0 %v1205, 3
    %v1215 = vpop.permute.xlu0 %1214
    %1216 = vrot.lane.b32.xlu0 %v1206, 3
    %v1217 = vpop.permute.xlu0 %1216
    %1218 = vrot.lane.b32.xlu0 %v1207, 3
    %v1219 = vpop.permute.xlu0 %1218
    %v1224 = vmul.f32 %v31, %v1213
    %v1225 = vmul.f32 %v32, %v1215
    %v1226 = vmul.f32 %v33, %v1217
    %v1227 = vmul.f32 %v34, %v1219
    %v1228 = vmul.f32 %v1224, 0.5
    %v1229 = vmul.f32 %v1225, 0.5
    %v1230 = vmul.f32 %v1226, 0.5
    %v1231 = vmul.f32 %v1227, 0.5
    %v1232 = vtanh.pop %v1228
    %v1233 = vtanh.pop %v1229
    %v1234 = vtanh.pop %v1230
    %v1235 = vtanh.pop %v1231
    %v1236 = vmul.f32 %v1232, 0.5
    %v1237 = vmul.f32 %v1233, 0.5
    %v1238 = vmul.f32 %v1234, 0.5
    %v1239 = vmul.f32 %v1235, 0.5
    %v1240 = vadd.f32 %v1236, 0.5
    %v1241 = vadd.f32 %v1237, 0.5
    %v1242 = vadd.f32 %v1238, 0.5
    %v1243 = vadd.f32 %v1239, 0.5
    %1245 = vset.pattern.permute.xlu0 3
    %1246 = vperm.xlu0 %1245, %v1240
    %v1247 = vpop.permute.xlu0 %1246
    %1250 = vset.pattern.permute.xlu0 3
    %1251 = vperm.xlu0 %1250, %v1241
    %v1252 = vpop.permute.xlu0 %1251
    %1255 = vset.pattern.permute.xlu0 3
    %1256 = vperm.xlu0 %1255, %v1242
    %v1257 = vpop.permute.xlu0 %1256
    %1260 = vset.pattern.permute.xlu0 3
    %1261 = vperm.xlu0 %1260, %v1243
    %v1262 = vpop.permute.xlu0 %1261
    %v1264 = vmul.f32 %v1010, %v1247
    %v1265 = vmul.f32 %v1011, %v1247
    %v1266 = vmul.f32 %v1012, %v1252
    %v1267 = vmul.f32 %v1013, %v1252
    %v1268 = vmul.f32 %v1014, %v1257
    %v1269 = vmul.f32 %v1015, %v1257
    %v1270 = vmul.f32 %v1016, %v1262
    %v1271 = vmul.f32 %v1017, %v1262
    %v1272 = vld [vmem:[%s3 + $0x40] sm:$0xff]
    %v1273 = vld [vmem:[%s3 + $0x48] sm:$0xff]
    %v1274 = vld [vmem:[%s3 + $0x50] sm:$0xff]
    %v1275 = vld [vmem:[%s3 + $0x58] sm:$0xff]
    %v1276 = vmax.f32 %v1264, 0.0
    %v1277 = vmax.f32 %v1265, 0.0
    %v1278 = vmax.f32 %v1266, 0.0
    %v1279 = vmax.f32 %v1267, 0.0
    %v1280 = vmax.f32 %v1268, 0.0
    %v1281 = vmax.f32 %v1269, 0.0
    %v1282 = vmax.f32 %v1270, 0.0
    %v1283 = vmax.f32 %v1271, 0.0
    %1284 = vset.pattern.permute.xlu0 4
    %1285 = vperm.xlu0 %1284, %v31
    %v1286 = vpop.permute.xlu0 %1285
    %1288 = vset.pattern.permute.xlu0 4
    %1289 = vperm.xlu0 %1288, %v32
    %v1290 = vpop.permute.xlu0 %1289
    %1292 = vset.pattern.permute.xlu0 4
    %1293 = vperm.xlu0 %1292, %v33
    %v1294 = vpop.permute.xlu0 %1293
    %1296 = vset.pattern.permute.xlu0 4
    %1297 = vperm.xlu0 %1296, %v34
    %v1298 = vpop.permute.xlu0 %1297
    %v1301 = vsel %vm671, %v1272, 0
    %v1304 = vsel %vm671, %v1273, 0
    %v1307 = vsel %vm671, %v1274, 0
    %v1310 = vsel %vm671, %v1275, 0
    %1312 = vmatprep.subr.mxu0 %v1277
    %1313 = vmatpush1.msra.mxu0 %v1276
    %1314 = vmatprep.subr.mxu0 %v1279
    %1315 = vmatpush1.msra.mxu0 %v1278
    %1316 = vmatprep.subr.mxu0 %v1281
    %1317 = vmatpush1.msra.mxu0 %v1280
    %1318 = vmatprep.subr.mxu0 %v1283
    %1319 = vmatpush1.msra.mxu0 %v1282
    %1320 = vmatprep.subr.mxu0 0.0
    %1321 = vmatpush1.msra.mxu0 0.0
    %1322 = vmatprep.subr.mxu0 0.0
    %1323 = vmatpush1.msra.mxu0 0.0
    %1324 = vmatprep.subr.mxu0 0.0
    %1325 = vmatpush1.msra.mxu0 0.0
    %1326 = vmatprep.subr.mxu0 0.0
    %1327 = vmatpush1.msra.mxu0 0.0
    %1328 = vmatprep.subr.mxu0 0.0
    %1329 = vmatpush1.msra.mxu0 0.0
    %1330 = vmatprep.subr.mxu0 0.0
    %1331 = vmatpush1.msra.mxu0 0.0
    %1332 = vmatprep.subr.mxu0 0.0
    %1333 = vmatpush1.msra.mxu0 0.0
    %1334 = vmatprep.subr.mxu0 0.0
    %1335 = vmatpush1.msra.mxu0 0.0
    %1336 = vmatprep.subr.mxu0 0.0
    %1337 = vmatpush1.msra.mxu0 0.0
    %1338 = vmatprep.subr.mxu0 0.0
    %1339 = vmatpush1.msra.mxu0 0.0
    %1340 = vmatprep.subr.mxu0 0.0
    %1341 = vmatpush1.msra.mxu0 0.0
    %1342 = vmatprep.subr.mxu0 0.0
    %1343 = vmatpush1.msra.mxu0 0.0
    %1344 = vmatprep.subr.mxu0 0.0
    %1345 = vmatpush1.msra.mxu0 0.0
    %1346 = vmatprep.subr.mxu0 0.0
    %1347 = vmatpush1.msra.mxu0 0.0
    %1348 = vmatprep.subr.mxu0 0.0
    %1349 = vmatpush1.msra.mxu0 0.0
    %1350 = vmatprep.subr.mxu0 0.0
    %1351 = vmatpush1.msra.mxu0 0.0
    %1352 = vmatprep.subr.mxu0 0.0
    %1353 = vmatpush1.msra.mxu0 0.0
    %1354 = vmatprep.subr.mxu0 0.0
    %1355 = vmatpush1.msra.mxu0 0.0
    %1356 = vmatprep.subr.mxu0 0.0
    %1357 = vmatpush1.msra.mxu0 0.0
    %1358 = vmatprep.subr.mxu0 0.0
    %1359 = vmatpush1.msra.mxu0 0.0
    %1360 = vmatprep.subr.mxu0 0.0
    %1361 = vmatpush1.msra.mxu0 0.0
    %1362 = vmatprep.subr.mxu0 0.0
    %1363 = vmatpush1.msra.mxu0 0.0
    %1364 = vmatprep.subr.mxu0 0.0
    %1365 = vmatpush1.msra.mxu0 0.0
    %1366 = vmatprep.subr.mxu0 0.0
    %1367 = vmatpush1.msra.mxu0 0.0
    %1368 = vmatprep.subr.mxu0 0.0
    %1369 = vmatpush1.msra.mxu0 0.0
    %1370 = vmatprep.subr.mxu0 0.0
    %1371 = vmatpush1.msra.mxu0 0.0
    %1372 = vmatprep.subr.mxu0 0.0
    %1373 = vmatpush1.msra.mxu0 0.0
    %1374 = vmatprep.subr.mxu0 0.0
    %1375 = vmatpush1.msra.mxu0 0.0
    %1376 = vmatprep.mubr.f32.mxu0 0.0
    %1377 = vmatmul.mubr.f32.gmra.mrb[0].mxu0 %v1301
    %v1378 = vpop.f32.mrb[0].mxu0
    %v1379 = vadd.f32 %v1286, %v1378
    %v1380 = vpop.f32.mrb[0].mxu0
    %v1381 = vadd.f32 %v1286, %v1380
    %1382 = vmatprep.mubr.f32.mxu0 0.0
    %1383 = vmatmul.mubr.f32.gmra.mrb[0].mxu0 %v1304
    %v1384 = vpop.f32.mrb[0].mxu0
    %v1385 = vadd.f32 %v1290, %v1384
    %v1386 = vpop.f32.mrb[0].mxu0
    %v1387 = vadd.f32 %v1290, %v1386
    %1388 = vmatprep.mubr.f32.mxu0 0.0
    %1389 = vmatmul.mubr.f32.gmra.mrb[0].mxu0 %v1307
    %v1390 = vpop.f32.mrb[0].mxu0
    %v1391 = vadd.f32 %v1294, %v1390
    %v1392 = vpop.f32.mrb[0].mxu0
    %v1393 = vadd.f32 %v1294, %v1392
    %1394 = vmatprep.mubr.f32.mxu0 0.0
    %1395 = vmatmul.mubr.f32.gmra.mrb[0].mxu0 %v1310
    %v1396 = vpop.f32.mrb[0].mxu0
    %v1397 = vadd.f32 %v1298, %v1396
    %v1398 = vpop.f32.mrb[0].mxu0
    %v1399 = vadd.f32 %v1298, %v1398
    %1400 = vdwg.mxu0
    %v1401 = vmax.f32 %v1379, 0.0
    %v1402 = vmax.f32 %v1381, 0.0
    %v1403 = vmax.f32 %v1385, 0.0
    %v1404 = vmax.f32 %v1387, 0.0
    %v1405 = vmax.f32 %v1391, 0.0
    %v1406 = vmax.f32 %v1393, 0.0
    %v1407 = vmax.f32 %v1397, 0.0
    %v1408 = vmax.f32 %v1399, 0.0
    %1409 = vst [vmem:[%s4] sm:$0xff] %v1401
    %1410 = vst [vmem:[%s4 + $0x8] sm:$0xff] %v1402
    %1411 = vst [vmem:[%s4 + $0x10] sm:$0xff] %v1403
    %1412 = vst [vmem:[%s4 + $0x18] sm:$0xff] %v1404
    %1413 = vst [vmem:[%s4 + $0x20] sm:$0xff] %v1405
    %1414 = vst [vmem:[%s4 + $0x28] sm:$0xff] %v1406
    %1415 = vst [vmem:[%s4 + $0x30] sm:$0xff] %v1407
    %1416 = vst [vmem:[%s4 + $0x38] sm:$0xff] %v1408
    // Predicated region
    $region22: #{shallow_decoder_block.1} parent=1 // pred_check
      _
    $region23: #{shallow_decoder_block.1} parent=1 // pred_check_branch
      %1418 = sbr.rel (0) target = $region25
    $region24: #{shallow_decoder_block.1} parent=1 // pred_region
      _
    $region25: #{shallow_decoder_block.1} parent=1 // pred_fallthru
      _
    // Predicated region
    $region26: #{shallow_decoder_block.1} parent=1 // pred_check
      _
    $region27: #{shallow_decoder_block.1} parent=1 // pred_check_branch
      %1420 = sbr.rel (0) target = $region29
    $region28: #{shallow_decoder_block.1} parent=1 // pred_region
      _
    $region29: #{shallow_decoder_block.1} parent=1 // pred_fallthru
      _
    %1421 = vsyncpa [#allocation3], 1

</llo_original>
